<compile_context>
chip_gen: v7x
topology: tpu7x:2x2x1
jax: 0.10.0
libtpu: 0.0.40
codegen_flags: <defaults>
</compile_context>

<pallas_src>
import functools

import jax
import jax.numpy as jnp
from jax.experimental import pallas as pl
from jax.experimental.pallas import tpu as pltpu

EPS = 1e-5  # PyTorch GroupNorm default


# ---------------------------------------------------------------------------
# Kernel
# ---------------------------------------------------------------------------
def _gn_scale_shift(h_rows, pvec, mask, mask_t, hw):
    """Per-sample GroupNorm fold:  GN(h + bias) == h * scale + shift.

    h_rows: list (len = block_batch) of (hw, K) f32 pre-bias conv outputs.
    pvec:   (3, K) f32 packed [conv_bias; gamma; beta].
    mask:   (K, G) one-hot channel->group;  mask_t: (G, K).
    Returns lists of per-sample (1, K) scale and shift rows (f32).
    """
    bb = len(h_rows)
    k = h_rows[0].shape[1]
    g = mask.shape[1]
    npg = float(hw * (k // g))

    bias, gamma, beta = pvec[0:1, :], pvec[1:2, :], pvec[2:3, :]

    # per-channel sum / sum-of-squares per sample (sublane reductions)
    s = jnp.concatenate(
        [jnp.sum(h, axis=0, keepdims=True) for h in h_rows], axis=0)      # (bb,K)
    sq = jnp.concatenate(
        [jnp.sum(h * h, axis=0, keepdims=True) for h in h_rows], axis=0)  # (bb,K)

    # fold the conv bias into the statistics (saves a full-tile bias add)
    s_b = s + hw * bias
    sq_b = sq + 2.0 * bias * s + hw * (bias * bias)

    # ONE stacked dot: per-group sums of [sum; sumsq]
    gstats = jnp.dot(jnp.concatenate([s_b, sq_b], axis=0), mask,
                     preferred_element_type=jnp.float32)                  # (2bb,G)
    mean_g = gstats[:bb] * (1.0 / npg)
    var_g = gstats[bb:] * (1.0 / npg) - mean_g * mean_g
    inv_g = jax.lax.rsqrt(var_g + EPS)

    # ONE stacked dot: broadcast group values back to channels
    crow = jnp.dot(jnp.concatenate([mean_g, inv_g], axis=0), mask_t,
                   preferred_element_type=jnp.float32)                    # (2bb,K)
    mean_c, inv_c = crow[:bb], crow[bb:]

    scale = inv_c * gamma                      # (bb, K)
    shift = beta + (bias - mean_c) * scale     # (bb, K)
    return ([scale[b:b + 1] for b in range(bb)],
            [shift[b:b + 1] for b in range(bb)])


def _adapter_kernel(x_ref, w1_ref, p1_ref, m1_ref, m1t_ref,
                    w2_ref, p2_ref, m2_ref, m2t_ref, o_ref,
                    *, block_batch, matmul_dtype):
    rows, c = x_ref.shape
    hw = rows // block_batch

    x = x_ref[...]                                              # (bb*hw, C) f32

    # ---- 1x1 conv #1 on the whole block (bias folded into GN1 shift) ----
    h = jnp.dot(x.astype(matmul_dtype), w1_ref[...],
                preferred_element_type=jnp.float32)             # (bb*hw, hidden)

    h_rows = [h[b * hw:(b + 1) * hw] for b in range(block_batch)]
    sc1, sh1 = _gn_scale_shift(h_rows, p1_ref[...], m1_ref[...], m1t_ref[...], hw)

    w2 = w2_ref[...]
    y_rows = []
    for b in range(block_batch):
        # GroupNorm #1 + ReLU fused into a single scale/shift/max pass
        hb = jnp.maximum(h_rows[b] * sc1[b] + sh1[b], 0.0)
        # ---- 1x1 conv #2 (bias folded into GN2 shift) ----
        y_rows.append(jnp.dot(hb.astype(matmul_dtype), w2,
                              preferred_element_type=jnp.float32))  # (hw, C)

    sc2, sh2 = _gn_scale_shift(y_rows, p2_ref[...], m2_ref[...], m2t_ref[...], hw)

    for b in range(block_batch):
        # GroupNorm #2 + residual add + final ReLU in one pass
        o_ref[b * hw:(b + 1) * hw, :] = jnp.maximum(
            x[b * hw:(b + 1) * hw] + y_rows[b] * sc2[b] + sh2[b], 0.0)


# ---------------------------------------------------------------------------
# Wrapper
# ---------------------------------------------------------------------------
def _group_mask(num_channels, num_groups):
    gsize = num_channels // num_groups
    ch = jnp.arange(num_channels)
    return (ch[:, None] // gsize == jnp.arange(num_groups)[None, :]).astype(
        jnp.float32)


def _choose_block_batch(n, hw, c, hidden,
                        vmem_budget_bytes=24 << 20,
                        target_step_bytes=512 << 10,
                        max_unroll=8):
    """Pack samples per grid step: big enough to amortize the ~0.35us/step
    overhead, small enough for VMEM, and >=2 grid steps for v7x megacore."""
    per_sample = 4 * hw * (4 * c + 2 * hidden)      # rough fused working set
    by_vmem = max(1, vmem_budget_bytes // per_sample)
    by_grid = max(1, n // 2) if n >= 2 else 1
    by_target = max(1, -(-target_step_bytes // per_sample))
    bb = int(min(by_vmem, by_grid, by_target, max_unroll, n))
    while n % bb:
        bb -= 1
    return max(1, bb)


def domain_adapter_pallas(x_nlc, params, *, block_batch=None,
                          matmul_dtype=jnp.float32,
                          vmem_limit_bytes=32 * 1024 * 1024):
    """x_nlc: (N, H*W, C) float32 (channels-last); returns (N, H*W, C) f32.

    matmul_dtype defaults to f32 (runs on every backend; this kernel is
    memory-bound at these shapes, so bf16 MXU operands are not required).
    """
    n, hw, c = x_nlc.shape
    (w1, b1, g1, be1, w2, b2, g2, be2, groups1, groups2) = params
    hidden = w1.shape[1]
    assert hidden % groups1 == 0 and c % groups2 == 0, \
        "GroupNorm requires channels %% groups == 0"
    assert hw % 8 == 0, "H*W must be a multiple of 8 (sublane tiling)"

    bb = _choose_block_batch(n, hw, c, hidden) if block_batch is None else block_batch
    assert n % bb == 0

    m1 = _group_mask(hidden, groups1)
    m2 = _group_mask(c, groups2)
    p1 = jnp.stack([b1, g1, be1]).astype(jnp.float32)     # (3, hidden)
    p2 = jnp.stack([b2, g2, be2]).astype(jnp.float32)     # (3, C)
    w1m = w1.astype(matmul_dtype)
    w2m = w2.astype(matmul_dtype)

    x2d = x_nlc.reshape(n * hw, c)          # lane-dense (rows, C) slab
    rows_blk = bb * hw

    const = lambda shape: pl.BlockSpec(shape, lambda i: (0, 0))
    grid_spec = pltpu.PrefetchScalarGridSpec(
        num_scalar_prefetch=0,
        grid=(n // bb,),
        in_specs=[
            pl.BlockSpec((rows_blk, c), lambda i: (i, 0)),  # x rows
            const((c, hidden)),         # w1 (matmul dtype)
            const((3, hidden)),         # packed [b1; gamma1; beta1]
            const((hidden, groups1)),   # group mask 1
            const((groups1, hidden)),   # group mask 1^T
            const((hidden, c)),         # w2 (matmul dtype)
            const((3, c)),              # packed [b2; gamma2; beta2]
            const((c, groups2)),        # group mask 2
            const((groups2, c)),        # group mask 2^T
        ],
        out_specs=pl.BlockSpec((rows_blk, c), lambda i: (i, 0)),
    )

    kernel = functools.partial(_adapter_kernel, block_batch=bb,
                               matmul_dtype=matmul_dtype)
    out2d = pl.pallas_call(
        kernel,
        out_shape=jax.ShapeDtypeStruct((n * hw, c), jnp.float32),
        grid_spec=grid_spec,
        compiler_params=pltpu.CompilerParams(
            dimension_semantics=("parallel",),
            vmem_limit_bytes=vmem_limit_bytes),
    )(x2d, w1m, p1, m1, m1.T, w2m, p2, m2, m2.T)
    return out2d.reshape(n, hw, c)


# ---------------------------------------------------------------------------
# Pure-JAX reference (mirrors PyTorch NCHW semantics; all-f32)
# ---------------------------------------------------------------------------
def domain_adapter_ref(x_nchw, params):
    (w1, b1, g1, be1, w2, b2, g2, be2, groups1, groups2) = params

    def mm(lhs, rhs, eq):
        return jnp.einsum(eq, lhs, rhs, preferred_element_type=jnp.float32)

    def gn(y, groups, gamma, beta):
        nn_, cc, hh, ww = y.shape
        yg = y.reshape(nn_, groups, cc // groups, hh, ww)
        mu = yg.mean(axis=(2, 3, 4), keepdims=True)
        var = ((yg - mu) ** 2).mean(axis=(2, 3, 4), keepdims=True)
        yn = ((yg - mu) / jnp.sqrt(var + EPS)).reshape(nn_, cc, hh, ww)
        return yn * gamma.reshape(1, -1, 1, 1) + beta.reshape(1, -1, 1, 1)

    h = mm(x_nchw, w1, "nchw,cd->ndhw") + b1.reshape(1, -1, 1, 1)
    h = gn(h, groups1, g1, be1)
    h = jnp.maximum(h, 0.0)
    y = mm(h, w2, "ndhw,dc->nchw") + b2.reshape(1, -1, 1, 1)
    y = gn(y, groups2, g2, be2)
    return jnp.maximum(x_nchw + y, 0.0)


def make_params(key, in_channels, reduction=4):
    hidden = max(in_channels // reduction, 16)
    groups1 = min(32, hidden)
    groups2 = min(32, in_channels)
    k = jax.random.split(key, 8)
    # conv weights stored as (Cin, Cout) for the channels-last matmul layout
    w1 = 0.1 * jax.random.normal(k[0], (in_channels, hidden), jnp.float32)
    b1 = 0.5 * jax.random.normal(k[1], (hidden,), jnp.float32)
    w2 = 0.1 * jax.random.normal(k[2], (hidden, in_channels), jnp.float32)
    b2 = 0.5 * jax.random.normal(k[3], (in_channels,), jnp.float32)
    g1 = 1.0 + 0.1 * jax.random.normal(k[4], (hidden,), jnp.float32)
    be1 = 0.1 * jax.random.normal(k[5], (hidden,), jnp.float32)
    g2 = 1.0 + 0.1 * jax.random.normal(k[6], (in_channels,), jnp.float32)
    be2 = 0.1 * jax.random.normal(k[7], (in_channels,), jnp.float32)
    return (w1, b1, g1, be1, w2, b2, g2, be2, groups1, groups2)


def _to_nlc(x_nchw):
    n, c, h, w = x_nchw.shape
    return jnp.transpose(x_nchw, (0, 2, 3, 1)).reshape(n, h * w, c)


def _to_nchw(x_nlc, h, w):
    n, _, c = x_nlc.shape
    return jnp.transpose(x_nlc.reshape(n, h, w, c), (0, 3, 1, 2))


if __name__ == "__main__":
    key = jax.random.PRNGKey(0)

    # config 1: lane-dense C=128 (hidden=32), 2 samples -> 2 parallel grid steps
    # config 2: smaller spatial, N=4 -> exercises sample packing (block_batch=2)
    configs = [(2, 128, 16, 16), (4, 128, 8, 8)]

    for (N, C, H, W) in configs:
        kx, kp, key = jax.random.split(key, 3)
        x_nchw = jax.random.normal(kx, (N, C, H, W), jnp.float32)
        params = make_params(kp, C, reduction=4)
        x_nlc = _to_nlc(x_nchw)

        out_nlc = jax.block_until_ready(domain_adapter_pallas(x_nlc, params))
        out_nchw = _to_nchw(out_nlc, H, W)

        ref_f32 = domain_adapter_ref(x_nchw, params)
        err = float(jnp.max(jnp.abs(out_nchw - ref_f32)))
        # Tolerance covers backend-default f32 matmul precision on the MXU.
        assert jnp.allclose(out_nchw, ref_f32, rtol=5e-2, atol=5e-2), err

    print("KERNEL_OK")
</pallas_src>

<mosaic_0001>
module attributes {stable_mosaic.version = 11 : i64} {
  func.func @_adapter_kernel(%arg0: i32, %arg1: memref<256x128xf32, #tpu.memory_space<vmem>>, %arg2: memref<128x32xf32, #tpu.memory_space<vmem>>, %arg3: memref<3x32xf32, #tpu.memory_space<vmem>>, %arg4: memref<32x32xf32, #tpu.memory_space<vmem>>, %arg5: memref<32x32xf32, #tpu.memory_space<vmem>>, %arg6: memref<32x128xf32, #tpu.memory_space<vmem>>, %arg7: memref<3x128xf32, #tpu.memory_space<vmem>>, %arg8: memref<128x32xf32, #tpu.memory_space<vmem>>, %arg9: memref<32x128xf32, #tpu.memory_space<vmem>>, %arg10: memref<256x128xf32, #tpu.memory_space<vmem>>) attributes {dimension_semantics = [#tpu.dimension_semantics<parallel>], iteration_bounds = array<i64: 2>, scalar_prefetch = 0 : i64, scratch_operands = 0 : i64, tpu.core_type = #tpu.core_type<tc>, window_params = [{transform_indices = @transform_0, window_bounds = array<i64: 256, 128>}, {pipeline_mode = #tpu.pipeline_mode<synchronous>, transform_indices = @transform_1, window_bounds = array<i64: 128, 32>}, {pipeline_mode = #tpu.pipeline_mode<synchronous>, transform_indices = @transform_2, window_bounds = array<i64: 3, 32>}, {pipeline_mode = #tpu.pipeline_mode<synchronous>, transform_indices = @transform_3, window_bounds = array<i64: 32, 32>}, {pipeline_mode = #tpu.pipeline_mode<synchronous>, transform_indices = @transform_4, window_bounds = array<i64: 32, 32>}, {pipeline_mode = #tpu.pipeline_mode<synchronous>, transform_indices = @transform_5, window_bounds = array<i64: 32, 128>}, {pipeline_mode = #tpu.pipeline_mode<synchronous>, transform_indices = @transform_6, window_bounds = array<i64: 3, 128>}, {pipeline_mode = #tpu.pipeline_mode<synchronous>, transform_indices = @transform_7, window_bounds = array<i64: 128, 32>}, {pipeline_mode = #tpu.pipeline_mode<synchronous>, transform_indices = @transform_8, window_bounds = array<i64: 32, 128>}, {transform_indices = @transform_9, window_bounds = array<i64: 256, 128>}]} {
    %c0 = arith.constant 0 : index
    %c0_0 = arith.constant 0 : index
    %0 = vector.load %arg1[%c0, %c0_0] : memref<256x128xf32, #tpu.memory_space<vmem>>, vector<256x128xf32>
    %c0_1 = arith.constant 0 : index
    %c0_2 = arith.constant 0 : index
    %1 = vector.load %arg2[%c0_1, %c0_2] : memref<128x32xf32, #tpu.memory_space<vmem>>, vector<128x32xf32>
    %cst = arith.constant dense<0.000000e+00> : vector<256x32xf32>
    %2 = tpu.matmul %0, %1, %cst {dimension_numbers = #tpu.dot_dimension_numbers<[1], [0], [0], [1], [0, 0, 1, 1], [], []>} : vector<256x128xf32>, vector<128x32xf32>, vector<256x32xf32> -> vector<256x32xf32>
    %c0_3 = arith.constant 0 : index
    %c0_4 = arith.constant 0 : index
    %3 = vector.load %arg3[%c0_3, %c0_4] : memref<3x32xf32, #tpu.memory_space<vmem>>, vector<3x32xf32>
    %c0_5 = arith.constant 0 : index
    %c0_6 = arith.constant 0 : index
    %4 = vector.load %arg4[%c0_5, %c0_6] : memref<32x32xf32, #tpu.memory_space<vmem>>, vector<32x32xf32>
    %c0_7 = arith.constant 0 : index
    %c0_8 = arith.constant 0 : index
    %5 = vector.load %arg5[%c0_7, %c0_8] : memref<32x32xf32, #tpu.memory_space<vmem>>, vector<32x32xf32>
    %6 = vector.extract_strided_slice %3 {offsets = [0, 0], sizes = [1, 32], strides = [1, 1]} : vector<3x32xf32> to vector<1x32xf32>
    %7 = vector.extract_strided_slice %3 {offsets = [1, 0], sizes = [1, 32], strides = [1, 1]} : vector<3x32xf32> to vector<1x32xf32>
    %8 = vector.extract_strided_slice %3 {offsets = [2, 0], sizes = [1, 32], strides = [1, 1]} : vector<3x32xf32> to vector<1x32xf32>
    %cst_9 = arith.constant dense<0.000000e+00> : vector<32xf32>
    %9 = vector.multi_reduction <add>, %2, %cst_9 [0] : vector<256x32xf32> to vector<32xf32>
    %10 = vector.shape_cast %9 : vector<32xf32> to vector<1x32xf32>
    %11 = arith.mulf %2, %2 : vector<256x32xf32>
    %cst_10 = arith.constant dense<0.000000e+00> : vector<32xf32>
    %12 = vector.multi_reduction <add>, %11, %cst_10 [0] : vector<256x32xf32> to vector<32xf32>
    %13 = vector.shape_cast %12 : vector<32xf32> to vector<1x32xf32>
    %cst_11 = arith.constant 2.560000e+02 : f32
    %14 = vector.broadcast %cst_11 : f32 to vector<1x32xf32>
    %15 = arith.mulf %14, %6 : vector<1x32xf32>
    %16 = arith.addf %10, %15 : vector<1x32xf32>
    %cst_12 = arith.constant 2.000000e+00 : f32
    %17 = vector.broadcast %cst_12 : f32 to vector<1x32xf32>
    %18 = arith.mulf %17, %6 : vector<1x32xf32>
    %19 = arith.mulf %18, %10 : vector<1x32xf32>
    %20 = arith.addf %13, %19 : vector<1x32xf32>
    %21 = arith.mulf %6, %6 : vector<1x32xf32>
    %cst_13 = arith.constant 2.560000e+02 : f32
    %22 = vector.broadcast %cst_13 : f32 to vector<1x32xf32>
    %23 = arith.mulf %22, %21 : vector<1x32xf32>
    %24 = arith.addf %20, %23 : vector<1x32xf32>
    %25 = tpu.concatenate %16, %24 in 0 : vector<1x32xf32>, vector<1x32xf32> -> vector<2x32xf32>
    %cst_14 = arith.constant dense<0.000000e+00> : vector<2x32xf32>
    %26 = tpu.matmul %25, %4, %cst_14 {dimension_numbers = #tpu.dot_dimension_numbers<[1], [0], [0], [1], [0, 0, 1, 1], [], []>} : vector<2x32xf32>, vector<32x32xf32>, vector<2x32xf32> -> vector<2x32xf32>
    %27 = vector.extract_strided_slice %26 {offsets = [0, 0], sizes = [1, 32], strides = [1, 1]} : vector<2x32xf32> to vector<1x32xf32>
    %cst_15 = arith.constant 3.906250e-03 : f32
    %28 = vector.broadcast %cst_15 : f32 to vector<1x32xf32>
    %29 = arith.mulf %27, %28 : vector<1x32xf32>
    %30 = vector.extract_strided_slice %26 {offsets = [1, 0], sizes = [1, 32], strides = [1, 1]} : vector<2x32xf32> to vector<1x32xf32>
    %cst_16 = arith.constant 3.906250e-03 : f32
    %31 = vector.broadcast %cst_16 : f32 to vector<1x32xf32>
    %32 = arith.mulf %30, %31 : vector<1x32xf32>
    %33 = arith.mulf %29, %29 : vector<1x32xf32>
    %34 = arith.subf %32, %33 : vector<1x32xf32>
    %cst_17 = arith.constant 9.99999974E-6 : f32
    %35 = vector.broadcast %cst_17 : f32 to vector<1x32xf32>
    %36 = arith.addf %34, %35 : vector<1x32xf32>
    %37 = math.rsqrt %36 : vector<1x32xf32>
    %38 = tpu.concatenate %29, %37 in 0 : vector<1x32xf32>, vector<1x32xf32> -> vector<2x32xf32>
    %cst_18 = arith.constant dense<0.000000e+00> : vector<2x32xf32>
    %39 = tpu.matmul %38, %5, %cst_18 {dimension_numbers = #tpu.dot_dimension_numbers<[1], [0], [0], [1], [0, 0, 1, 1], [], []>} : vector<2x32xf32>, vector<32x32xf32>, vector<2x32xf32> -> vector<2x32xf32>
    %40 = vector.extract_strided_slice %39 {offsets = [0, 0], sizes = [1, 32], strides = [1, 1]} : vector<2x32xf32> to vector<1x32xf32>
    %41 = vector.extract_strided_slice %39 {offsets = [1, 0], sizes = [1, 32], strides = [1, 1]} : vector<2x32xf32> to vector<1x32xf32>
    %42 = arith.mulf %41, %7 : vector<1x32xf32>
    %43 = arith.subf %6, %40 : vector<1x32xf32>
    %44 = arith.mulf %43, %42 : vector<1x32xf32>
    %45 = arith.addf %8, %44 : vector<1x32xf32>
    %c0_19 = arith.constant 0 : index
    %c0_20 = arith.constant 0 : index
    %46 = vector.load %arg6[%c0_19, %c0_20] : memref<32x128xf32, #tpu.memory_space<vmem>>, vector<32x128xf32>
    %47 = vector.broadcast %42 : vector<1x32xf32> to vector<256x32xf32>
    %48 = arith.mulf %2, %47 : vector<256x32xf32>
    %49 = vector.broadcast %45 : vector<1x32xf32> to vector<256x32xf32>
    %50 = arith.addf %48, %49 : vector<256x32xf32>
    %cst_21 = arith.constant 0.000000e+00 : f32
    %51 = vector.broadcast %cst_21 : f32 to vector<256x32xf32>
    %52 = arith.maximumf %50, %51 : vector<256x32xf32>
    %cst_22 = arith.constant dense<0.000000e+00> : vector<256x128xf32>
    %53 = tpu.matmul %52, %46, %cst_22 {dimension_numbers = #tpu.dot_dimension_numbers<[1], [0], [0], [1], [0, 0, 1, 1], [], []>} : vector<256x32xf32>, vector<32x128xf32>, vector<256x128xf32> -> vector<256x128xf32>
    %c0_23 = arith.constant 0 : index
    %c0_24 = arith.constant 0 : index
    %54 = vector.load %arg7[%c0_23, %c0_24] : memref<3x128xf32, #tpu.memory_space<vmem>>, vector<3x128xf32>
    %c0_25 = arith.constant 0 : index
    %c0_26 = arith.constant 0 : index
    %55 = vector.load %arg8[%c0_25, %c0_26] : memref<128x32xf32, #tpu.memory_space<vmem>>, vector<128x32xf32>
    %c0_27 = arith.constant 0 : index
    %c0_28 = arith.constant 0 : index
    %56 = vector.load %arg9[%c0_27, %c0_28] : memref<32x128xf32, #tpu.memory_space<vmem>>, vector<32x128xf32>
    %57 = vector.extract_strided_slice %54 {offsets = [0, 0], sizes = [1, 128], strides = [1, 1]} : vector<3x128xf32> to vector<1x128xf32>
    %58 = vector.extract_strided_slice %54 {offsets = [1, 0], sizes = [1, 128], strides = [1, 1]} : vector<3x128xf32> to vector<1x128xf32>
    %59 = vector.extract_strided_slice %54 {offsets = [2, 0], sizes = [1, 128], strides = [1, 1]} : vector<3x128xf32> to vector<1x128xf32>
    %cst_29 = arith.constant dense<0.000000e+00> : vector<128xf32>
    %60 = vector.multi_reduction <add>, %53, %cst_29 [0] : vector<256x128xf32> to vector<128xf32>
    %61 = vector.shape_cast %60 : vector<128xf32> to vector<1x128xf32>
    %62 = arith.mulf %53, %53 : vector<256x128xf32>
    %cst_30 = arith.constant dense<0.000000e+00> : vector<128xf32>
    %63 = vector.multi_reduction <add>, %62, %cst_30 [0] : vector<256x128xf32> to vector<128xf32>
    %64 = vector.shape_cast %63 : vector<128xf32> to vector<1x128xf32>
    %cst_31 = arith.constant 2.560000e+02 : f32
    %65 = vector.broadcast %cst_31 : f32 to vector<1x128xf32>
    %66 = arith.mulf %65, %57 : vector<1x128xf32>
    %67 = arith.addf %61, %66 : vector<1x128xf32>
    %cst_32 = arith.constant 2.000000e+00 : f32
    %68 = vector.broadcast %cst_32 : f32 to vector<1x128xf32>
    %69 = arith.mulf %68, %57 : vector<1x128xf32>
    %70 = arith.mulf %69, %61 : vector<1x128xf32>
    %71 = arith.addf %64, %70 : vector<1x128xf32>
    %72 = arith.mulf %57, %57 : vector<1x128xf32>
    %cst_33 = arith.constant 2.560000e+02 : f32
    %73 = vector.broadcast %cst_33 : f32 to vector<1x128xf32>
    %74 = arith.mulf %73, %72 : vector<1x128xf32>
    %75 = arith.addf %71, %74 : vector<1x128xf32>
    %76 = tpu.concatenate %67, %75 in 0 : vector<1x128xf32>, vector<1x128xf32> -> vector<2x128xf32>
    %cst_34 = arith.constant dense<0.000000e+00> : vector<2x32xf32>
    %77 = tpu.matmul %76, %55, %cst_34 {dimension_numbers = #tpu.dot_dimension_numbers<[1], [0], [0], [1], [0, 0, 1, 1], [], []>} : vector<2x128xf32>, vector<128x32xf32>, vector<2x32xf32> -> vector<2x32xf32>
    %78 = vector.extract_strided_slice %77 {offsets = [0, 0], sizes = [1, 32], strides = [1, 1]} : vector<2x32xf32> to vector<1x32xf32>
    %cst_35 = arith.constant 9.765625E-4 : f32
    %79 = vector.broadcast %cst_35 : f32 to vector<1x32xf32>
    %80 = arith.mulf %78, %79 : vector<1x32xf32>
    %81 = vector.extract_strided_slice %77 {offsets = [1, 0], sizes = [1, 32], strides = [1, 1]} : vector<2x32xf32> to vector<1x32xf32>
    %cst_36 = arith.constant 9.765625E-4 : f32
    %82 = vector.broadcast %cst_36 : f32 to vector<1x32xf32>
    %83 = arith.mulf %81, %82 : vector<1x32xf32>
    %84 = arith.mulf %80, %80 : vector<1x32xf32>
    %85 = arith.subf %83, %84 : vector<1x32xf32>
    %cst_37 = arith.constant 9.99999974E-6 : f32
    %86 = vector.broadcast %cst_37 : f32 to vector<1x32xf32>
    %87 = arith.addf %85, %86 : vector<1x32xf32>
    %88 = math.rsqrt %87 : vector<1x32xf32>
    %89 = tpu.concatenate %80, %88 in 0 : vector<1x32xf32>, vector<1x32xf32> -> vector<2x32xf32>
    %cst_38 = arith.constant dense<0.000000e+00> : vector<2x128xf32>
    %90 = tpu.matmul %89, %56, %cst_38 {dimension_numbers = #tpu.dot_dimension_numbers<[1], [0], [0], [1], [0, 0, 1, 1], [], []>} : vector<2x32xf32>, vector<32x128xf32>, vector<2x128xf32> -> vector<2x128xf32>
    %91 = vector.extract_strided_slice %90 {offsets = [0, 0], sizes = [1, 128], strides = [1, 1]} : vector<2x128xf32> to vector<1x128xf32>
    %92 = vector.extract_strided_slice %90 {offsets = [1, 0], sizes = [1, 128], strides = [1, 1]} : vector<2x128xf32> to vector<1x128xf32>
    %93 = arith.mulf %92, %58 : vector<1x128xf32>
    %94 = arith.subf %57, %91 : vector<1x128xf32>
    %95 = arith.mulf %94, %93 : vector<1x128xf32>
    %96 = arith.addf %59, %95 : vector<1x128xf32>
    %97 = vector.broadcast %93 : vector<1x128xf32> to vector<256x128xf32>
    %98 = arith.mulf %53, %97 : vector<256x128xf32>
    %99 = arith.addf %0, %98 : vector<256x128xf32>
    %100 = vector.broadcast %96 : vector<1x128xf32> to vector<256x128xf32>
    %101 = arith.addf %99, %100 : vector<256x128xf32>
    %cst_39 = arith.constant 0.000000e+00 : f32
    %102 = vector.broadcast %cst_39 : f32 to vector<256x128xf32>
    %103 = arith.maximumf %101, %102 : vector<256x128xf32>
    %c0_40 = arith.constant 0 : index
    %c0_41 = arith.constant 0 : index
    %104 = vector.load %arg10[%c0_40, %c0_41] : memref<256x128xf32, #tpu.memory_space<vmem>>, vector<256x128xf32>
    tpu.vector_store %arg10[%c0_40, %c0_41], %103 {strides = array<i32>} : memref<256x128xf32, #tpu.memory_space<vmem>>, vector<256x128xf32>,
    return
  }
  func.func @transform_0(%arg0: i32) -> (i32, i32) {
    %c0_i32 = arith.constant 0 : i32
    %c0_i32_0 = arith.constant 0 : i32
    return %arg0, %c0_i32 : i32, i32
  }
  func.func @transform_1(%arg0: i32) -> (i32, i32) {
    %c0_i32 = arith.constant 0 : i32
    %c0_i32_0 = arith.constant 0 : i32
    %c0_i32_1 = arith.constant 0 : i32
    return %c0_i32, %c0_i32_0 : i32, i32
  }
  func.func @transform_2(%arg0: i32) -> (i32, i32) {
    %c0_i32 = arith.constant 0 : i32
    %c0_i32_0 = arith.constant 0 : i32
    %c0_i32_1 = arith.constant 0 : i32
    return %c0_i32, %c0_i32_0 : i32, i32
  }
  func.func @transform_3(%arg0: i32) -> (i32, i32) {
    %c0_i32 = arith.constant 0 : i32
    %c0_i32_0 = arith.constant 0 : i32
    %c0_i32_1 = arith.constant 0 : i32
    return %c0_i32, %c0_i32_0 : i32, i32
  }
  func.func @transform_4(%arg0: i32) -> (i32, i32) {
    %c0_i32 = arith.constant 0 : i32
    %c0_i32_0 = arith.constant 0 : i32
    %c0_i32_1 = arith.constant 0 : i32
    return %c0_i32, %c0_i32_0 : i32, i32
  }
  func.func @transform_5(%arg0: i32) -> (i32, i32) {
    %c0_i32 = arith.constant 0 : i32
    %c0_i32_0 = arith.constant 0 : i32
    %c0_i32_1 = arith.constant 0 : i32
    return %c0_i32, %c0_i32_0 : i32, i32
  }
  func.func @transform_6(%arg0: i32) -> (i32, i32) {
    %c0_i32 = arith.constant 0 : i32
    %c0_i32_0 = arith.constant 0 : i32
    %c0_i32_1 = arith.constant 0 : i32
    return %c0_i32, %c0_i32_0 : i32, i32
  }
  func.func @transform_7(%arg0: i32) -> (i32, i32) {
    %c0_i32 = arith.constant 0 : i32
    %c0_i32_0 = arith.constant 0 : i32
    %c0_i32_1 = arith.constant 0 : i32
    return %c0_i32, %c0_i32_0 : i32, i32
  }
  func.func @transform_8(%arg0: i32) -> (i32, i32) {
    %c0_i32 = arith.constant 0 : i32
    %c0_i32_0 = arith.constant 0 : i32
    %c0_i32_1 = arith.constant 0 : i32
    return %c0_i32, %c0_i32_0 : i32, i32
  }
  func.func @transform_9(%arg0: i32) -> (i32, i32) {
    %c0_i32 = arith.constant 0 : i32
    %c0_i32_0 = arith.constant 0 : i32
    return %arg0, %c0_i32 : i32, i32
  }
}

</mosaic_0001>

<llo_original>
// kernel: tpu_custom_call.1
$region0: #{tpu_custom_call.1}
  #allocation0 [shape = 'u32[]', space=smem, size = 0x4, offset = 0x4, fixed_abs, tag = 'smem constant byte address 0x4 - core index']
  #allocation1 [shape = 'u32[144,128]{1,0:T(1,128)}', space=vmem, size = 0x12000, scoped, tag = 'internal scratch']
  %s0 = inlined_call_operand.hbm [shape: f32[512,128], index: 0, kind: input, shape index: {}]
  %s1 = inlined_call_operand.vmem [shape: f32[128,32], index: 1, kind: input, shape index: {}]
  %s2 = inlined_call_operand.vmem [shape: f32[3,32], index: 2, kind: input, shape index: {}]
  %s3 = inlined_call_operand.vmem [shape: f32[32,32], index: 3, kind: input, shape index: {}]
  %s4 = inlined_call_operand.vmem [shape: f32[32,32], index: 4, kind: input, shape index: {}]
  %s5 = inlined_call_operand.vmem [shape: f32[32,128], index: 5, kind: input, shape index: {}]
  %s6 = inlined_call_operand.vmem [shape: f32[3,128], index: 6, kind: input, shape index: {}]
  %s7 = inlined_call_operand.vmem [shape: f32[128,32], index: 7, kind: input, shape index: {}]
  %s8 = inlined_call_operand.vmem [shape: f32[32,128], index: 8, kind: input, shape index: {}]
  %s9 = inlined_call_operand.hbm [shape: f32[512,128], index: 9, kind: output, shape index: {}]
  %s10 = sld [smem:[#allocation0]]
  $region73: #{tpu_custom_call.1} parent=0
    _
  %s12 = ssub.s32 1, %s10
  %s13 = scalar_select 0, %s12, %s10
  $region1: #{tpu_custom_call.1} parent=0
    #allocation2 [shape = 'u8[262144]{0}', space=vmem, size = 0x40000, scoped, tag = 'input window, operand 0']
    #allocation3 [shape = 's32[2]{0}', space=sflag, size = 0x8, scoped, tag = 'scoped memory for tpu_custom_call.1']
    #allocation4 [shape = 's32[2]{0}', space=sflag, size = 0x8, scoped, tag = 'scoped memory for tpu_custom_call.1']
    #allocation5 [shape = 'u8[262144]{0}', space=vmem, size = 0x40000, scoped, tag = 'output window, operand 0']
    %14 = vsyncpa [#allocation3], 0
    %s15 = scalar_lea.sflag [#allocation3], 1
    %16 = vsyncpa %s15, 0
    %17 = vsyncpa [#allocation4], 0
    %s18 = scalar_lea.sflag [#allocation4], 1
    %19 = vsyncpa %s18, 0
    loop: start=0, step=1, limit=4
    $region2: #{tpu_custom_call.1} parent=1 // loop_pre_header
      _
    $region3: #{tpu_custom_call.1} parent=1 // loop_header
      %s21 = sphi 0, %s25
      %p22 = scmp.ge.s32.totalorder %s21, 4
      %s31 = sphi 0, %s33
      %s34 = sphi 0, %s31
      %s35 = sphi 0, %s34
      %s51 = sphi 0, %s35
      %s55 = sphi 0, %s55
      %s57 = sphi 0, %s55
      %s58 = sphi 0, %s57
      %s72 = sphi 0, %s58
      %s76 = sphi 0, %s76
      %s78 = sphi 0, %s76
      %s79 = sphi 0, %s78
      %s93 = sphi 0, %s79
      %s97 = sphi 0, %s97
      %s99 = sphi 0, %s97
      %s100 = sphi 0, %s99
      %s114 = sphi 0, %s100
      %s118 = sphi 0, %s118
      %s120 = sphi 0, %s118
      %s121 = sphi 0, %s120
      %s135 = sphi 0, %s121
      %s139 = sphi 0, %s139
      %s141 = sphi 0, %s139
      %s142 = sphi 0, %s141
      %s156 = sphi 0, %s142
      %s160 = sphi 0, %s160
      %s162 = sphi 0, %s160
      %s163 = sphi 0, %s162
      %s177 = sphi 0, %s163
      %s181 = sphi 0, %s181
      %s183 = sphi 0, %s181
      %s184 = sphi 0, %s183
      %s198 = sphi 0, %s184
      %s202 = sphi 0, %s202
      %s204 = sphi 0, %s202
      %s205 = sphi 0, %s204
      %s219 = sphi 0, %s205
      %s225 = sphi 0, %s227
      %s228 = sphi 0, %s225
      %s229 = sphi 0, %s228
      %s245 = sphi 0, %s229
    $region4: #{tpu_custom_call.1} parent=1 // loop_header_branch
      %24 = sbr.rel (%p22) target = $region8
    $region5: #{tpu_custom_call.1} parent=1 // loop_body
      %s26 = ssub.s32 %s21, 1
      %s27 = ssub.s32 %s21, 2
      %s28 = sadd.s32 %s21, 1
      %s29 = ssub.s32 %s21, %s28
      %p30 = scmp.eq.s32.totalorder %s29, 0
      %s32 = sadd.s32 %s31, 1
      %s33 = scalar_select %p30, %s31, %s32
      %p36 = pneg %p30
      %p37 = scmp.eq.s32.totalorder %s21, 1
      %p38 = por %p36, %p37
      %p39 = scmp.ne.s32.totalorder %s31, %s34
      %p40 = scmp.eq.s32.totalorder %s21, 0
      %p41 = por %p39, %p40
      %p42 = scmp.ne.s32.totalorder %s31, %s34
      %p43 = scmp.eq.s32.totalorder %s26, 1
      %p44 = por %p42, %p43
      %p45 = scmp.ne.s32.totalorder %s34, %s35
      %p46 = scmp.eq.s32.totalorder %s26, 0
      %p47 = por %p45, %p46
      %p48 = scmp.ne.s32.totalorder %s34, %s35
      %p49 = scmp.eq.s32.totalorder %s27, 1
      %p50 = por %p48, %p49
      %p52 = scmp.ne.s32.totalorder %s35, %s51
      %p53 = scmp.eq.s32.totalorder %s27, 0
      %p54 = por %p52, %p53
      %s56 = sadd.s32 %s55, 1
      %p59 = scmp.eq.s32.totalorder %s21, 1
      %p60 = scmp.ne.s32.totalorder %s55, %s57
      %p61 = scmp.eq.s32.totalorder %s21, 0
      %p62 = por %p60, %p61
      %p63 = scmp.ne.s32.totalorder %s55, %s57
      %p64 = scmp.eq.s32.totalorder %s26, 1
      %p65 = por %p63, %p64
      %p66 = scmp.ne.s32.totalorder %s57, %s58
      %p67 = scmp.eq.s32.totalorder %s26, 0
      %p68 = por %p66, %p67
      %p69 = scmp.ne.s32.totalorder %s57, %s58
      %p70 = scmp.eq.s32.totalorder %s27, 1
      %p71 = por %p69, %p70
      %p73 = scmp.ne.s32.totalorder %s58, %s72
      %p74 = scmp.eq.s32.totalorder %s27, 0
      %p75 = por %p73, %p74
      %s77 = sadd.s32 %s76, 1
      %p80 = scmp.eq.s32.totalorder %s21, 1
      %p81 = scmp.ne.s32.totalorder %s76, %s78
      %p82 = scmp.eq.s32.totalorder %s21, 0
      %p83 = por %p81, %p82
      %p84 = scmp.ne.s32.totalorder %s76, %s78
      %p85 = scmp.eq.s32.totalorder %s26, 1
      %p86 = por %p84, %p85
      %p87 = scmp.ne.s32.totalorder %s78, %s79
      %p88 = scmp.eq.s32.totalorder %s26, 0
      %p89 = por %p87, %p88
      %p90 = scmp.ne.s32.totalorder %s78, %s79
      %p91 = scmp.eq.s32.totalorder %s27, 1
      %p92 = por %p90, %p91
      %p94 = scmp.ne.s32.totalorder %s79, %s93
      %p95 = scmp.eq.s32.totalorder %s27, 0
      %p96 = por %p94, %p95
      %s98 = sadd.s32 %s97, 1
      %p101 = scmp.eq.s32.totalorder %s21, 1
      %p102 = scmp.ne.s32.totalorder %s97, %s99
      %p103 = scmp.eq.s32.totalorder %s21, 0
      %p104 = por %p102, %p103
      %p105 = scmp.ne.s32.totalorder %s97, %s99
      %p106 = scmp.eq.s32.totalorder %s26, 1
      %p107 = por %p105, %p106
      %p108 = scmp.ne.s32.totalorder %s99, %s100
      %p109 = scmp.eq.s32.totalorder %s26, 0
      %p110 = por %p108, %p109
      %p111 = scmp.ne.s32.totalorder %s99, %s100
      %p112 = scmp.eq.s32.totalorder %s27, 1
      %p113 = por %p111, %p112
      %p115 = scmp.ne.s32.totalorder %s100, %s114
      %p116 = scmp.eq.s32.totalorder %s27, 0
      %p117 = por %p115, %p116
      %s119 = sadd.s32 %s118, 1
      %p122 = scmp.eq.s32.totalorder %s21, 1
      %p123 = scmp.ne.s32.totalorder %s118, %s120
      %p124 = scmp.eq.s32.totalorder %s21, 0
      %p125 = por %p123, %p124
      %p126 = scmp.ne.s32.totalorder %s118, %s120
      %p127 = scmp.eq.s32.totalorder %s26, 1
      %p128 = por %p126, %p127
      %p129 = scmp.ne.s32.totalorder %s120, %s121
      %p130 = scmp.eq.s32.totalorder %s26, 0
      %p131 = por %p129, %p130
      %p132 = scmp.ne.s32.totalorder %s120, %s121
      %p133 = scmp.eq.s32.totalorder %s27, 1
      %p134 = por %p132, %p133
      %p136 = scmp.ne.s32.totalorder %s121, %s135
      %p137 = scmp.eq.s32.totalorder %s27, 0
      %p138 = por %p136, %p137
      %s140 = sadd.s32 %s139, 1
      %p143 = scmp.eq.s32.totalorder %s21, 1
      %p144 = scmp.ne.s32.totalorder %s139, %s141
      %p145 = scmp.eq.s32.totalorder %s21, 0
      %p146 = por %p144, %p145
      %p147 = scmp.ne.s32.totalorder %s139, %s141
      %p148 = scmp.eq.s32.totalorder %s26, 1
      %p149 = por %p147, %p148
      %p150 = scmp.ne.s32.totalorder %s141, %s142
      %p151 = scmp.eq.s32.totalorder %s26, 0
      %p152 = por %p150, %p151
      %p153 = scmp.ne.s32.totalorder %s141, %s142
      %p154 = scmp.eq.s32.totalorder %s27, 1
      %p155 = por %p153, %p154
      %p157 = scmp.ne.s32.totalorder %s142, %s156
      %p158 = scmp.eq.s32.totalorder %s27, 0
      %p159 = por %p157, %p158
      %s161 = sadd.s32 %s160, 1
      %p164 = scmp.eq.s32.totalorder %s21, 1
      %p165 = scmp.ne.s32.totalorder %s160, %s162
      %p166 = scmp.eq.s32.totalorder %s21, 0
      %p167 = por %p165, %p166
      %p168 = scmp.ne.s32.totalorder %s160, %s162
      %p169 = scmp.eq.s32.totalorder %s26, 1
      %p170 = por %p168, %p169
      %p171 = scmp.ne.s32.totalorder %s162, %s163
      %p172 = scmp.eq.s32.totalorder %s26, 0
      %p173 = por %p171, %p172
      %p174 = scmp.ne.s32.totalorder %s162, %s163
      %p175 = scmp.eq.s32.totalorder %s27, 1
      %p176 = por %p174, %p175
      %p178 = scmp.ne.s32.totalorder %s163, %s177
      %p179 = scmp.eq.s32.totalorder %s27, 0
      %p180 = por %p178, %p179
      %s182 = sadd.s32 %s181, 1
      %p185 = scmp.eq.s32.totalorder %s21, 1
      %p186 = scmp.ne.s32.totalorder %s181, %s183
      %p187 = scmp.eq.s32.totalorder %s21, 0
      %p188 = por %p186, %p187
      %p189 = scmp.ne.s32.totalorder %s181, %s183
      %p190 = scmp.eq.s32.totalorder %s26, 1
      %p191 = por %p189, %p190
      %p192 = scmp.ne.s32.totalorder %s183, %s184
      %p193 = scmp.eq.s32.totalorder %s26, 0
      %p194 = por %p192, %p193
      %p195 = scmp.ne.s32.totalorder %s183, %s184
      %p196 = scmp.eq.s32.totalorder %s27, 1
      %p197 = por %p195, %p196
      %p199 = scmp.ne.s32.totalorder %s184, %s198
      %p200 = scmp.eq.s32.totalorder %s27, 0
      %p201 = por %p199, %p200
      %s203 = sadd.s32 %s202, 1
      %p206 = scmp.eq.s32.totalorder %s21, 1
      %p207 = scmp.ne.s32.totalorder %s202, %s204
      %p208 = scmp.eq.s32.totalorder %s21, 0
      %p209 = por %p207, %p208
      %p210 = scmp.ne.s32.totalorder %s202, %s204
      %p211 = scmp.eq.s32.totalorder %s26, 1
      %p212 = por %p210, %p211
      %p213 = scmp.ne.s32.totalorder %s204, %s205
      %p214 = scmp.eq.s32.totalorder %s26, 0
      %p215 = por %p213, %p214
      %p216 = scmp.ne.s32.totalorder %s204, %s205
      %p217 = scmp.eq.s32.totalorder %s27, 1
      %p218 = por %p216, %p217
      %p220 = scmp.ne.s32.totalorder %s205, %s219
      %p221 = scmp.eq.s32.totalorder %s27, 0
      %p222 = por %p220, %p221
      %s223 = ssub.s32 %s21, %s28
      %p224 = scmp.eq.s32.totalorder %s223, 0
      %s226 = sadd.s32 %s225, 1
      %s227 = scalar_select %p224, %s225, %s226
      %p230 = pneg %p224
      %p231 = scmp.eq.s32.totalorder %s21, 1
      %p232 = por %p230, %p231
      %p233 = scmp.ne.s32.totalorder %s225, %s228
      %p234 = scmp.eq.s32.totalorder %s21, 0
      %p235 = por %p233, %p234
      %p236 = scmp.ne.s32.totalorder %s225, %s228
      %p237 = scmp.eq.s32.totalorder %s26, 1
      %p238 = por %p236, %p237
      %p239 = scmp.ne.s32.totalorder %s228, %s229
      %p240 = scmp.eq.s32.totalorder %s26, 0
      %p241 = por %p239, %p240
      %p242 = scmp.ne.s32.totalorder %s228, %s229
      %p243 = scmp.eq.s32.totalorder %s27, 1
      %p244 = por %p242, %p243
      %p246 = scmp.ne.s32.totalorder %s229, %s245
      %p247 = scmp.eq.s32.totalorder %s27, 0
      %p248 = por %p246, %p247
      %p249 = scmp.le.s32.totalorder 1, %s21
      %p250 = scmp.lt.s32.totalorder %s21, 3
      %p251 = pnand %p249, %p250
      %p252 = pneg %p251
      // Predicated region
      $region9: #{tpu_custom_call.1} parent=5 // pred_check
        _
      $region10: #{tpu_custom_call.1} parent=5 // pred_check_branch
        %254 = sbr.rel (%p251) target = $region12
      $region11: #{tpu_custom_call.1} parent=5 // pred_region
        %s255 = ssub.s32 %s21, 1
        // Predicated region
        $region13: #{tpu_custom_call.1} parent=11 // pred_check
          %p256 = pneg %p68
        $region14: #{tpu_custom_call.1} parent=11 // pred_check_branch
          %258 = sbr.rel (%p256) target = $region16
        $region15: #{tpu_custom_call.1} parent=11 // pred_region
          _
        $region16: #{tpu_custom_call.1} parent=11 // pred_fallthru
          _
        // Predicated region
        $region17: #{tpu_custom_call.1} parent=11 // pred_check
          %p259 = pneg %p89
        $region18: #{tpu_custom_call.1} parent=11 // pred_check_branch
          %261 = sbr.rel (%p259) target = $region20
        $region19: #{tpu_custom_call.1} parent=11 // pred_region
          _
        $region20: #{tpu_custom_call.1} parent=11 // pred_fallthru
          _
        // Predicated region
        $region21: #{tpu_custom_call.1} parent=11 // pred_check
          %p262 = pneg %p110
        $region22: #{tpu_custom_call.1} parent=11 // pred_check_branch
          %264 = sbr.rel (%p262) target = $region24
        $region23: #{tpu_custom_call.1} parent=11 // pred_region
          _
        $region24: #{tpu_custom_call.1} parent=11 // pred_fallthru
          _
        // Predicated region
        $region25: #{tpu_custom_call.1} parent=11 // pred_check
          %p265 = pneg %p131
        $region26: #{tpu_custom_call.1} parent=11 // pred_check_branch
          %267 = sbr.rel (%p265) target = $region28
        $region27: #{tpu_custom_call.1} parent=11 // pred_region
          _
        $region28: #{tpu_custom_call.1} parent=11 // pred_fallthru
          _
        // Predicated region
        $region29: #{tpu_custom_call.1} parent=11 // pred_check
          %p268 = pneg %p152
        $region30: #{tpu_custom_call.1} parent=11 // pred_check_branch
          %270 = sbr.rel (%p268) target = $region32
        $region31: #{tpu_custom_call.1} parent=11 // pred_region
          _
        $region32: #{tpu_custom_call.1} parent=11 // pred_fallthru
          _
        // Predicated region
        $region33: #{tpu_custom_call.1} parent=11 // pred_check
          %p271 = pneg %p173
        $region34: #{tpu_custom_call.1} parent=11 // pred_check_branch
          %273 = sbr.rel (%p271) target = $region36
        $region35: #{tpu_custom_call.1} parent=11 // pred_region
          _
        $region36: #{tpu_custom_call.1} parent=11 // pred_fallthru
          _
        // Predicated region
        $region37: #{tpu_custom_call.1} parent=11 // pred_check
          %p274 = pneg %p194
        $region38: #{tpu_custom_call.1} parent=11 // pred_check_branch
          %276 = sbr.rel (%p274) target = $region40
        $region39: #{tpu_custom_call.1} parent=11 // pred_region
          _
        $region40: #{tpu_custom_call.1} parent=11 // pred_fallthru
          _
        // Predicated region
        $region41: #{tpu_custom_call.1} parent=11 // pred_check
          %p277 = pneg %p215
        $region42: #{tpu_custom_call.1} parent=11 // pred_check_branch
          %279 = sbr.rel (%p277) target = $region44
        $region43: #{tpu_custom_call.1} parent=11 // pred_region
          _
        $region44: #{tpu_custom_call.1} parent=11 // pred_fallthru
          _
      $region12: #{tpu_custom_call.1} parent=5 // pred_fallthru
        _
      %p280 = scmp.lt.s32.totalorder %s21, 2
      // Predicated region
      $region45: #{tpu_custom_call.1} parent=5 // pred_check
        %p281 = pneg %p280
      $region46: #{tpu_custom_call.1} parent=5 // pred_check_branch
        %283 = sbr.rel (%p281) target = $region48
      $region47: #{tpu_custom_call.1} parent=5 // pred_region
        // Predicated region
        $region49: #{tpu_custom_call.1} parent=47 // pred_check
          %p284 = pneg %p41
        $region50: #{tpu_custom_call.1} parent=47 // pred_check_branch
          %286 = sbr.rel (%p284) target = $region52
        $region51: #{tpu_custom_call.1} parent=47 // pred_region
          %s287 = sand.u32 %s31, 1
          %s288 = scalar_lea.sflag [#allocation3], %s287
          %s289 = sand.u32 %s31, 1
          %s290 = smul.addr %s289, 256
          %s291 = scalar_lea.vmem [#allocation2], %s290
          %s292 = smul.u32 32, %s21
          %s294 = ssub.s32 4096, 4096
          %295 = vsyncadd %s288, %s294
          %s296 = smul.addr %s292, 128
          %s297 = scalar_lea.hbm %s0, %s296
          %s298 = sshll.u32 %s291, 4
          %s299 = int_to_ptr.vmem [resolvable:$true] %s298
          %304 = dma.hbm_to_vmem [thread:$0]  %s297, 4096, %s299, %s288, 128, 128, 8
        $region52: #{tpu_custom_call.1} parent=47 // pred_fallthru
          _
      $region48: #{tpu_custom_call.1} parent=5 // pred_fallthru
        _
      %p305 = scmp.le.s32.totalorder 1, %s21
      %p306 = scmp.lt.s32.totalorder %s21, 3
      %p307 = pnand %p305, %p306
      %p308 = pneg %p307
      // Predicated region
      $region53: #{tpu_custom_call.1} parent=5 // pred_check
        _
      $region54: #{tpu_custom_call.1} parent=5 // pred_check_branch
        %310 = sbr.rel (%p307) target = $region56
      $region55: #{tpu_custom_call.1} parent=5 // pred_region
        %s311 = ssub.s32 %s21, 1
        %s312 = sand.u32 %s34, 1
        %s313 = scalar_lea.sflag [#allocation3], %s312
        %s314 = sand.u32 %s34, 1
        %s315 = smul.addr %s314, 256
        %s316 = scalar_lea.vmem [#allocation2], %s315
        // Predicated region
        $region57: #{tpu_custom_call.1} parent=55 // pred_check
          %p317 = pneg %p47
        $region58: #{tpu_custom_call.1} parent=55 // pred_check_branch
          %319 = sbr.rel (%p317) target = $region60
        $region59: #{tpu_custom_call.1} parent=55 // pred_region
          %320 = dma.done %s313, 4096
        $region60: #{tpu_custom_call.1} parent=55 // pred_fallthru
          _
        %s321 = sand.u32 %s34, 1
        %s322 = scalar_lea.sflag [#allocation3], %s321
        %s323 = sand.u32 %s34, 1
        %s324 = smul.addr %s323, 256
        %s325 = scalar_lea.vmem [#allocation2], %s324
        %p326 = pneg %p47
        %p327 = pneg %p44
        %p328 = pneg %p68
        %p329 = pneg %p65
        %p330 = pneg %p89
        %p331 = pneg %p86
        %p332 = pneg %p110
        %p333 = pneg %p107
        %p334 = pneg %p131
        %p335 = pneg %p128
        %p336 = pneg %p152
        %p337 = pneg %p149
        %p338 = pneg %p173
        %p339 = pneg %p170
        %p340 = pneg %p194
        %p341 = pneg %p191
        %p342 = pneg %p215
        %p343 = pneg %p212
        %p344 = pneg %p241
        %p345 = pneg %p238
        %s346 = sand.u32 %s228, 1
        %s347 = scalar_lea.sflag [#allocation4], %s346
        %s348 = sand.u32 %s228, 1
        %s349 = smul.addr %s348, 256
        %s350 = scalar_lea.vmem [#allocation5], %s349
        %s351 = smul.u32 32, %s26
        %s352 = smul.u32 32, %s26
        %v353 = vld [vmem:[%s316] sm:$0xff]
        %v354 = vld [vmem:[%s316 + $0x8] sm:$0xff]
        %v355 = vld [vmem:[%s316 + $0x10] sm:$0xff]
        %v356 = vld [vmem:[%s316 + $0x18] sm:$0xff]
        %v357 = vld [vmem:[%s316 + $0x20] sm:$0xff]
        %v358 = vld [vmem:[%s316 + $0x28] sm:$0xff]
        %v359 = vld [vmem:[%s316 + $0x30] sm:$0xff]
        %v360 = vld [vmem:[%s316 + $0x38] sm:$0xff]
        %v361 = vld [vmem:[%s316 + $0x40] sm:$0xff]
        %v362 = vld [vmem:[%s316 + $0x48] sm:$0xff]
        %v363 = vld [vmem:[%s316 + $0x50] sm:$0xff]
        %v364 = vld [vmem:[%s316 + $0x58] sm:$0xff]
        %v365 = vld [vmem:[%s316 + $0x60] sm:$0xff]
        %v366 = vld [vmem:[%s316 + $0x68] sm:$0xff]
        %v367 = vld [vmem:[%s316 + $0x70] sm:$0xff]
        %v368 = vld [vmem:[%s316 + $0x78] sm:$0xff]
        %v369 = vld [vmem:[%s316 + $0x80] sm:$0xff]
        %v370 = vld [vmem:[%s316 + $0x88] sm:$0xff]
        %v371 = vld [vmem:[%s316 + $0x90] sm:$0xff]
        %v372 = vld [vmem:[%s316 + $0x98] sm:$0xff]
        %v373 = vld [vmem:[%s316 + $0xa0] sm:$0xff]
        %v374 = vld [vmem:[%s316 + $0xa8] sm:$0xff]
        %v375 = vld [vmem:[%s316 + $0xb0] sm:$0xff]
        %v376 = vld [vmem:[%s316 + $0xb8] sm:$0xff]
        %v377 = vld [vmem:[%s316 + $0xc0] sm:$0xff]
        %v378 = vld [vmem:[%s316 + $0xc8] sm:$0xff]
        %v379 = vld [vmem:[%s316 + $0xd0] sm:$0xff]
        %v380 = vld [vmem:[%s316 + $0xd8] sm:$0xff]
        %v381 = vld [vmem:[%s316 + $0xe0] sm:$0xff]
        %v382 = vld [vmem:[%s316 + $0xe8] sm:$0xff]
        %v383 = vld [vmem:[%s316 + $0xf0] sm:$0xff]
        %v384 = vld [vmem:[%s316 + $0xf8] sm:$0xff]
        %v385 = vld [vmem:[%s1] sm:$0xff]
        %v386 = vld [vmem:[%s1 + $0x8] sm:$0xff]
        %v387 = vld [vmem:[%s1 + $0x10] sm:$0xff]
        %v388 = vld [vmem:[%s1 + $0x18] sm:$0xff]
        %v389 = vld [vmem:[%s1 + $0x20] sm:$0xff]
        %v390 = vld [vmem:[%s1 + $0x28] sm:$0xff]
        %v391 = vld [vmem:[%s1 + $0x30] sm:$0xff]
        %v392 = vld [vmem:[%s1 + $0x38] sm:$0xff]
        %v393 = vld [vmem:[%s1 + $0x40] sm:$0xff]
        %v394 = vld [vmem:[%s1 + $0x48] sm:$0xff]
        %v395 = vld [vmem:[%s1 + $0x50] sm:$0xff]
        %v396 = vld [vmem:[%s1 + $0x58] sm:$0xff]
        %v397 = vld [vmem:[%s1 + $0x60] sm:$0xff]
        %v398 = vld [vmem:[%s1 + $0x68] sm:$0xff]
        %v399 = vld [vmem:[%s1 + $0x70] sm:$0xff]
        %v400 = vld [vmem:[%s1 + $0x78] sm:$0xff]
        %401 = vmatprep.subr.mxu0 0.0
        %402 = vmatpush1.msra.mxu0 %v385
        %403 = vmatprep.subr.mxu0 0.0
        %404 = vmatpush1.msra.mxu0 %v386
        %405 = vmatprep.subr.mxu0 0.0
        %406 = vmatpush1.msra.mxu0 %v387
        %407 = vmatprep.subr.mxu0 0.0
        %408 = vmatpush1.msra.mxu0 %v388
        %409 = vmatprep.subr.mxu0 0.0
        %410 = vmatpush1.msra.mxu0 %v389
        %411 = vmatprep.subr.mxu0 0.0
        %412 = vmatpush1.msra.mxu0 %v390
        %413 = vmatprep.subr.mxu0 0.0
        %414 = vmatpush1.msra.mxu0 %v391
        %415 = vmatprep.subr.mxu0 0.0
        %416 = vmatpush1.msra.mxu0 %v392
        %417 = vmatprep.subr.mxu0 0.0
        %418 = vmatpush1.msra.mxu0 %v393
        %419 = vmatprep.subr.mxu0 0.0
        %420 = vmatpush1.msra.mxu0 %v394
        %421 = vmatprep.subr.mxu0 0.0
        %422 = vmatpush1.msra.mxu0 %v395
        %423 = vmatprep.subr.mxu0 0.0
        %424 = vmatpush1.msra.mxu0 %v396
        %425 = vmatprep.subr.mxu0 0.0
        %426 = vmatpush1.msra.mxu0 %v397
        %427 = vmatprep.subr.mxu0 0.0
        %428 = vmatpush1.msra.mxu0 %v398
        %429 = vmatprep.subr.mxu0 0.0
        %430 = vmatpush1.msra.mxu0 %v399
        %431 = vmatprep.subr.mxu0 0.0
        %432 = vmatpush1.msra.mxu0 %v400
        %433 = vmatprep.subr.mxu0 0.0
        %434 = vmatpush1.msra.mxu0 0.0
        %435 = vmatprep.subr.mxu0 0.0
        %436 = vmatpush1.msra.mxu0 0.0
        %437 = vmatprep.subr.mxu0 0.0
        %438 = vmatpush1.msra.mxu0 0.0
        %439 = vmatprep.subr.mxu0 0.0
        %440 = vmatpush1.msra.mxu0 0.0
        %441 = vmatprep.subr.mxu0 0.0
        %442 = vmatpush1.msra.mxu0 0.0
        %443 = vmatprep.subr.mxu0 0.0
        %444 = vmatpush1.msra.mxu0 0.0
        %445 = vmatprep.subr.mxu0 0.0
        %446 = vmatpush1.msra.mxu0 0.0
        %447 = vmatprep.subr.mxu0 0.0
        %448 = vmatpush1.msra.mxu0 0.0
        %449 = vmatprep.subr.mxu0 0.0
        %450 = vmatpush1.msra.mxu0 0.0
        %451 = vmatprep.subr.mxu0 0.0
        %452 = vmatpush1.msra.mxu0 0.0
        %453 = vmatprep.subr.mxu0 0.0
        %454 = vmatpush1.msra.mxu0 0.0
        %455 = vmatprep.subr.mxu0 0.0
        %456 = vmatpush1.msra.mxu0 0.0
        %457 = vmatprep.subr.mxu0 0.0
        %458 = vmatpush1.msra.mxu0 0.0
        %459 = vmatprep.subr.mxu0 0.0
        %460 = vmatpush1.msra.mxu0 0.0
        %461 = vmatprep.subr.mxu0 0.0
        %462 = vmatpush1.msra.mxu0 0.0
        %463 = vmatprep.subr.mxu0 0.0
        %464 = vmatpush1.msra.mxu0 0.0
        %465 = vmatprep.mubr.f32.mxu0 0.0
        %466 = vmatmul.mubr.f32.gmra.mrb[0].mxu0 %v353
        %v467 = vpop.f32.mrb[0].mxu0
        %v468 = vadd.f32 0.0, %v467
        %v469 = vpop.f32.mrb[0].mxu0
        %470 = vmatprep.mubr.f32.mxu0 0.0
        %471 = vmatmul.mubr.f32.gmra.mrb[0].mxu0 %v354
        %v472 = vpop.f32.mrb[0].mxu0
        %v473 = vadd.f32 0.0, %v472
        %v474 = vpop.f32.mrb[0].mxu0
        %475 = vmatprep.mubr.f32.mxu0 0.0
        %476 = vmatmul.mubr.f32.gmra.mrb[0].mxu0 %v355
        %v477 = vpop.f32.mrb[0].mxu0
        %v478 = vadd.f32 0.0, %v477
        %v479 = vpop.f32.mrb[0].mxu0
        %480 = vmatprep.mubr.f32.mxu0 0.0
        %481 = vmatmul.mubr.f32.gmra.mrb[0].mxu0 %v356
        %v482 = vpop.f32.mrb[0].mxu0
        %v483 = vadd.f32 0.0, %v482
        %v484 = vpop.f32.mrb[0].mxu0
        %485 = vmatprep.mubr.f32.mxu0 0.0
        %486 = vmatmul.mubr.f32.gmra.mrb[0].mxu0 %v357
        %v487 = vpop.f32.mrb[0].mxu0
        %v488 = vadd.f32 0.0, %v487
        %v489 = vpop.f32.mrb[0].mxu0
        %490 = vmatprep.mubr.f32.mxu0 0.0
        %491 = vmatmul.mubr.f32.gmra.mrb[0].mxu0 %v358
        %v492 = vpop.f32.mrb[0].mxu0
        %v493 = vadd.f32 0.0, %v492
        %v494 = vpop.f32.mrb[0].mxu0
        %495 = vmatprep.mubr.f32.mxu0 0.0
        %496 = vmatmul.mubr.f32.gmra.mrb[0].mxu0 %v359
        %v497 = vpop.f32.mrb[0].mxu0
        %v498 = vadd.f32 0.0, %v497
        %v499 = vpop.f32.mrb[0].mxu0
        %500 = vmatprep.mubr.f32.mxu0 0.0
        %501 = vmatmul.mubr.f32.gmra.mrb[0].mxu0 %v360
        %v502 = vpop.f32.mrb[0].mxu0
        %v503 = vadd.f32 0.0, %v502
        %v504 = vpop.f32.mrb[0].mxu0
        %505 = vmatprep.mubr.f32.mxu0 0.0
        %506 = vmatmul.mubr.f32.gmra.mrb[0].mxu0 %v361
        %v507 = vpop.f32.mrb[0].mxu0
        %v508 = vadd.f32 0.0, %v507
        %v509 = vpop.f32.mrb[0].mxu0
        %510 = vmatprep.mubr.f32.mxu0 0.0
        %511 = vmatmul.mubr.f32.gmra.mrb[0].mxu0 %v362
        %v512 = vpop.f32.mrb[0].mxu0
        %v513 = vadd.f32 0.0, %v512
        %v514 = vpop.f32.mrb[0].mxu0
        %515 = vmatprep.mubr.f32.mxu0 0.0
        %516 = vmatmul.mubr.f32.gmra.mrb[0].mxu0 %v363
        %v517 = vpop.f32.mrb[0].mxu0
        %v518 = vadd.f32 0.0, %v517
        %v519 = vpop.f32.mrb[0].mxu0
        %520 = vmatprep.mubr.f32.mxu0 0.0
        %521 = vmatmul.mubr.f32.gmra.mrb[0].mxu0 %v364
        %v522 = vpop.f32.mrb[0].mxu0
        %v523 = vadd.f32 0.0, %v522
        %v524 = vpop.f32.mrb[0].mxu0
        %525 = vmatprep.mubr.f32.mxu0 0.0
        %526 = vmatmul.mubr.f32.gmra.mrb[0].mxu0 %v365
        %v527 = vpop.f32.mrb[0].mxu0
        %v528 = vadd.f32 0.0, %v527
        %v529 = vpop.f32.mrb[0].mxu0
        %530 = vmatprep.mubr.f32.mxu0 0.0
        %531 = vmatmul.mubr.f32.gmra.mrb[0].mxu0 %v366
        %v532 = vpop.f32.mrb[0].mxu0
        %v533 = vadd.f32 0.0, %v532
        %v534 = vpop.f32.mrb[0].mxu0
        %535 = vmatprep.mubr.f32.mxu0 0.0
        %536 = vmatmul.mubr.f32.gmra.mrb[0].mxu0 %v367
        %v537 = vpop.f32.mrb[0].mxu0
        %v538 = vadd.f32 0.0, %v537
        %v539 = vpop.f32.mrb[0].mxu0
        %540 = vmatprep.mubr.f32.mxu0 0.0
        %541 = vmatmul.mubr.f32.gmra.mrb[0].mxu0 %v368
        %v542 = vpop.f32.mrb[0].mxu0
        %v543 = vadd.f32 0.0, %v542
        %v544 = vpop.f32.mrb[0].mxu0
        %545 = vmatprep.mubr.f32.mxu0 0.0
        %546 = vmatmul.mubr.f32.gmra.mrb[0].mxu0 %v369
        %v547 = vpop.f32.mrb[0].mxu0
        %v548 = vadd.f32 0.0, %v547
        %v549 = vpop.f32.mrb[0].mxu0
        %550 = vmatprep.mubr.f32.mxu0 0.0
        %551 = vmatmul.mubr.f32.gmra.mrb[0].mxu0 %v370
        %v552 = vpop.f32.mrb[0].mxu0
        %v553 = vadd.f32 0.0, %v552
        %v554 = vpop.f32.mrb[0].mxu0
        %555 = vmatprep.mubr.f32.mxu0 0.0
        %556 = vmatmul.mubr.f32.gmra.mrb[0].mxu0 %v371
        %v557 = vpop.f32.mrb[0].mxu0
        %v558 = vadd.f32 0.0, %v557
        %v559 = vpop.f32.mrb[0].mxu0
        %560 = vmatprep.mubr.f32.mxu0 0.0
        %561 = vmatmul.mubr.f32.gmra.mrb[0].mxu0 %v372
        %v562 = vpop.f32.mrb[0].mxu0
        %v563 = vadd.f32 0.0, %v562
        %v564 = vpop.f32.mrb[0].mxu0
        %565 = vmatprep.mubr.f32.mxu0 0.0
        %566 = vmatmul.mubr.f32.gmra.mrb[0].mxu0 %v373
        %v567 = vpop.f32.mrb[0].mxu0
        %v568 = vadd.f32 0.0, %v567
        %v569 = vpop.f32.mrb[0].mxu0
        %570 = vmatprep.mubr.f32.mxu0 0.0
        %571 = vmatmul.mubr.f32.gmra.mrb[0].mxu0 %v374
        %v572 = vpop.f32.mrb[0].mxu0
        %v573 = vadd.f32 0.0, %v572
        %v574 = vpop.f32.mrb[0].mxu0
        %575 = vmatprep.mubr.f32.mxu0 0.0
        %576 = vmatmul.mubr.f32.gmra.mrb[0].mxu0 %v375
        %v577 = vpop.f32.mrb[0].mxu0
        %v578 = vadd.f32 0.0, %v577
        %v579 = vpop.f32.mrb[0].mxu0
        %580 = vmatprep.mubr.f32.mxu0 0.0
        %581 = vmatmul.mubr.f32.gmra.mrb[0].mxu0 %v376
        %v582 = vpop.f32.mrb[0].mxu0
        %v583 = vadd.f32 0.0, %v582
        %v584 = vpop.f32.mrb[0].mxu0
        %585 = vmatprep.mubr.f32.mxu0 0.0
        %586 = vmatmul.mubr.f32.gmra.mrb[0].mxu0 %v377
        %v587 = vpop.f32.mrb[0].mxu0
        %v588 = vadd.f32 0.0, %v587
        %v589 = vpop.f32.mrb[0].mxu0
        %590 = vmatprep.mubr.f32.mxu0 0.0
        %591 = vmatmul.mubr.f32.gmra.mrb[0].mxu0 %v378
        %v592 = vpop.f32.mrb[0].mxu0
        %v593 = vadd.f32 0.0, %v592
        %v594 = vpop.f32.mrb[0].mxu0
        %595 = vmatprep.mubr.f32.mxu0 0.0
        %596 = vmatmul.mubr.f32.gmra.mrb[0].mxu0 %v379
        %v597 = vpop.f32.mrb[0].mxu0
        %v598 = vadd.f32 0.0, %v597
        %v599 = vpop.f32.mrb[0].mxu0
        %600 = vmatprep.mubr.f32.mxu0 0.0
        %601 = vmatmul.mubr.f32.gmra.mrb[0].mxu0 %v380
        %v602 = vpop.f32.mrb[0].mxu0
        %v603 = vadd.f32 0.0, %v602
        %v604 = vpop.f32.mrb[0].mxu0
        %605 = vmatprep.mubr.f32.mxu0 0.0
        %606 = vmatmul.mubr.f32.gmra.mrb[0].mxu0 %v381
        %v607 = vpop.f32.mrb[0].mxu0
        %v608 = vadd.f32 0.0, %v607
        %v609 = vpop.f32.mrb[0].mxu0
        %610 = vmatprep.mubr.f32.mxu0 0.0
        %611 = vmatmul.mubr.f32.gmra.mrb[0].mxu0 %v382
        %v612 = vpop.f32.mrb[0].mxu0
        %v613 = vadd.f32 0.0, %v612
        %v614 = vpop.f32.mrb[0].mxu0
        %615 = vmatprep.mubr.f32.mxu0 0.0
        %616 = vmatmul.mubr.f32.gmra.mrb[0].mxu0 %v383
        %v617 = vpop.f32.mrb[0].mxu0
        %v618 = vadd.f32 0.0, %v617
        %v619 = vpop.f32.mrb[0].mxu0
        %620 = vmatprep.mubr.f32.mxu0 0.0
        %621 = vmatmul.mubr.f32.gmra.mrb[0].mxu0 %v384
        %v622 = vpop.f32.mrb[0].mxu0
        %v623 = vadd.f32 0.0, %v622
        %v624 = vpop.f32.mrb[0].mxu0
        %625 = vdwg.mxu0
        %v626 = vld [vmem:[%s2] sm:$0x7]
        %v627 = vld [vmem:[%s3] sm:$0xff]
        %v628 = vld [vmem:[%s3 + $0x8] sm:$0xff]
        %v629 = vld [vmem:[%s3 + $0x10] sm:$0xff]
        %v630 = vld [vmem:[%s3 + $0x18] sm:$0xff]
        %v631 = vld [vmem:[%s4] sm:$0xff]
        %v632 = vld [vmem:[%s4 + $0x8] sm:$0xff]
        %v633 = vld [vmem:[%s4 + $0x10] sm:$0xff]
        %v634 = vld [vmem:[%s4 + $0x18] sm:$0xff]
        %vm635 = vcmask 261120
        %v636 = vsel %vm635, %v468, 0.0
        %v637 = vsel %vm635, %v473, 0.0
        %v638 = vadd.f32 %v636, %v637
        %v639 = vsel %vm635, %v478, 0.0
        %v640 = vadd.f32 %v638, %v639
        %v641 = vsel %vm635, %v483, 0.0
        %v642 = vadd.f32 %v640, %v641
        %v643 = vsel %vm635, %v488, 0.0
        %v644 = vadd.f32 %v642, %v643
        %v645 = vsel %vm635, %v493, 0.0
        %v646 = vadd.f32 %v644, %v645
        %v647 = vsel %vm635, %v498, 0.0
        %v648 = vadd.f32 %v646, %v647
        %v649 = vsel %vm635, %v503, 0.0
        %v650 = vadd.f32 %v648, %v649
        %v651 = vsel %vm635, %v508, 0.0
        %v652 = vadd.f32 %v650, %v651
        %v653 = vsel %vm635, %v513, 0.0
        %v654 = vadd.f32 %v652, %v653
        %v655 = vsel %vm635, %v518, 0.0
        %v656 = vadd.f32 %v654, %v655
        %v657 = vsel %vm635, %v523, 0.0
        %v658 = vadd.f32 %v656, %v657
        %v659 = vsel %vm635, %v528, 0.0
        %v660 = vadd.f32 %v658, %v659
        %v661 = vsel %vm635, %v533, 0.0
        %v662 = vadd.f32 %v660, %v661
        %v663 = vsel %vm635, %v538, 0.0
        %v664 = vadd.f32 %v662, %v663
        %v665 = vsel %vm635, %v543, 0.0
        %v666 = vadd.f32 %v664, %v665
        %v667 = vsel %vm635, %v548, 0.0
        %v668 = vadd.f32 %v666, %v667
        %v669 = vsel %vm635, %v553, 0.0
        %v670 = vadd.f32 %v668, %v669
        %v671 = vsel %vm635, %v558, 0.0
        %v672 = vadd.f32 %v670, %v671
        %v673 = vsel %vm635, %v563, 0.0
        %v674 = vadd.f32 %v672, %v673
        %v675 = vsel %vm635, %v568, 0.0
        %v676 = vadd.f32 %v674, %v675
        %v677 = vsel %vm635, %v573, 0.0
        %v678 = vadd.f32 %v676, %v677
        %v679 = vsel %vm635, %v578, 0.0
        %v680 = vadd.f32 %v678, %v679
        %v681 = vsel %vm635, %v583, 0.0
        %v682 = vadd.f32 %v680, %v681
        %v683 = vsel %vm635, %v588, 0.0
        %v684 = vadd.f32 %v682, %v683
        %v685 = vsel %vm635, %v593, 0.0
        %v686 = vadd.f32 %v684, %v685
        %v687 = vsel %vm635, %v598, 0.0
        %v688 = vadd.f32 %v686, %v687
        %v689 = vsel %vm635, %v603, 0.0
        %v690 = vadd.f32 %v688, %v689
        %v691 = vsel %vm635, %v608, 0.0
        %v692 = vadd.f32 %v690, %v691
        %v693 = vsel %vm635, %v613, 0.0
        %v694 = vadd.f32 %v692, %v693
        %v695 = vsel %vm635, %v618, 0.0
        %v696 = vadd.f32 %v694, %v695
        %v697 = vsel %vm635, %v623, 0.0
        %v698 = vadd.f32 %v696, %v697
        %v699 = vrot.slane %v698, 4
        %v700 = vadd.f32 %v698, %v699
        %v701 = vrot.slane %v700, 2
        %v702 = vadd.f32 %v700, %v701
        %v703 = vrot.slane %v702, 1
        %v704 = vadd.f32 %v702, %v703
        %v705 = vmul.f32 %v468, %v468
        %v706 = vmul.f32 %v473, %v473
        %v707 = vmul.f32 %v478, %v478
        %v708 = vmul.f32 %v483, %v483
        %v709 = vmul.f32 %v488, %v488
        %v710 = vmul.f32 %v493, %v493
        %v711 = vmul.f32 %v498, %v498
        %v712 = vmul.f32 %v503, %v503
        %v713 = vmul.f32 %v508, %v508
        %v714 = vmul.f32 %v513, %v513
        %v715 = vmul.f32 %v518, %v518
        %v716 = vmul.f32 %v523, %v523
        %v717 = vmul.f32 %v528, %v528
        %v718 = vmul.f32 %v533, %v533
        %v719 = vmul.f32 %v538, %v538
        %v720 = vmul.f32 %v543, %v543
        %v721 = vmul.f32 %v548, %v548
        %v722 = vmul.f32 %v553, %v553
        %v723 = vmul.f32 %v558, %v558
        %v724 = vmul.f32 %v563, %v563
        %v725 = vmul.f32 %v568, %v568
        %v726 = vmul.f32 %v573, %v573
        %v727 = vmul.f32 %v578, %v578
        %v728 = vmul.f32 %v583, %v583
        %v729 = vmul.f32 %v588, %v588
        %v730 = vmul.f32 %v593, %v593
        %v731 = vmul.f32 %v598, %v598
        %v732 = vmul.f32 %v603, %v603
        %v733 = vmul.f32 %v608, %v608
        %v734 = vmul.f32 %v613, %v613
        %v735 = vmul.f32 %v618, %v618
        %v736 = vmul.f32 %v623, %v623
        %v737 = vsel %vm635, %v705, 0.0
        %v738 = vsel %vm635, %v706, 0.0
        %v739 = vadd.f32 %v737, %v738
        %v740 = vsel %vm635, %v707, 0.0
        %v741 = vadd.f32 %v739, %v740
        %v742 = vsel %vm635, %v708, 0.0
        %v743 = vadd.f32 %v741, %v742
        %v744 = vsel %vm635, %v709, 0.0
        %v745 = vadd.f32 %v743, %v744
        %v746 = vsel %vm635, %v710, 0.0
        %v747 = vadd.f32 %v745, %v746
        %v748 = vsel %vm635, %v711, 0.0
        %v749 = vadd.f32 %v747, %v748
        %v750 = vsel %vm635, %v712, 0.0
        %v751 = vadd.f32 %v749, %v750
        %v752 = vsel %vm635, %v713, 0.0
        %v753 = vadd.f32 %v751, %v752
        %v754 = vsel %vm635, %v714, 0.0
        %v755 = vadd.f32 %v753, %v754
        %v756 = vsel %vm635, %v715, 0.0
        %v757 = vadd.f32 %v755, %v756
        %v758 = vsel %vm635, %v716, 0.0
        %v759 = vadd.f32 %v757, %v758
        %v760 = vsel %vm635, %v717, 0.0
        %v761 = vadd.f32 %v759, %v760
        %v762 = vsel %vm635, %v718, 0.0
        %v763 = vadd.f32 %v761, %v762
        %v764 = vsel %vm635, %v719, 0.0
        %v765 = vadd.f32 %v763, %v764
        %v766 = vsel %vm635, %v720, 0.0
        %v767 = vadd.f32 %v765, %v766
        %v768 = vsel %vm635, %v721, 0.0
        %v769 = vadd.f32 %v767, %v768
        %v770 = vsel %vm635, %v722, 0.0
        %v771 = vadd.f32 %v769, %v770
        %v772 = vsel %vm635, %v723, 0.0
        %v773 = vadd.f32 %v771, %v772
        %v774 = vsel %vm635, %v724, 0.0
        %v775 = vadd.f32 %v773, %v774
        %v776 = vsel %vm635, %v725, 0.0
        %v777 = vadd.f32 %v775, %v776
        %v778 = vsel %vm635, %v726, 0.0
        %v779 = vadd.f32 %v777, %v778
        %v780 = vsel %vm635, %v727, 0.0
        %v781 = vadd.f32 %v779, %v780
        %v782 = vsel %vm635, %v728, 0.0
        %v783 = vadd.f32 %v781, %v782
        %v784 = vsel %vm635, %v729, 0.0
        %v785 = vadd.f32 %v783, %v784
        %v786 = vsel %vm635, %v730, 0.0
        %v787 = vadd.f32 %v785, %v786
        %v788 = vsel %vm635, %v731, 0.0
        %v789 = vadd.f32 %v787, %v788
        %v790 = vsel %vm635, %v732, 0.0
        %v791 = vadd.f32 %v789, %v790
        %v792 = vsel %vm635, %v733, 0.0
        %v793 = vadd.f32 %v791, %v792
        %v794 = vsel %vm635, %v734, 0.0
        %v795 = vadd.f32 %v793, %v794
        %v796 = vsel %vm635, %v735, 0.0
        %v797 = vadd.f32 %v795, %v796
        %v798 = vsel %vm635, %v736, 0.0
        %v799 = vadd.f32 %v797, %v798
        %v800 = vrot.slane %v799, 4
        %v801 = vadd.f32 %v799, %v800
        %v802 = vrot.slane %v801, 2
        %v803 = vadd.f32 %v801, %v802
        %v804 = vrot.slane %v803, 1
        %v805 = vadd.f32 %v803, %v804
        %v806 = vmul.f32 %v626, 256.0
        %v807 = vadd.f32 %v704, %v806
        %v808 = vmul.f32 %v626, 2.0
        %v809 = vmul.f32 %v808, %v704
        %v810 = vadd.f32 %v805, %v809
        %v811 = vmul.f32 %v626, %v626
        %v812 = vmul.f32 %v811, 256.0
        %v813 = vadd.f32 %v810, %v812
        %v815 = vrot.slane %v813, 7
        %vm817 = vcmask 1040384
        %v818 = vsel %vm817, %v807, %v815
        %v820 = vsel %vm635, %v818, 0
        %822 = vmatprep.subr.mxu0 0.0
        %823 = vmatpush1.msra.mxu0 %v627
        %824 = vmatprep.subr.mxu0 0.0
        %825 = vmatpush1.msra.mxu0 %v628
        %826 = vmatprep.subr.mxu0 0.0
        %827 = vmatpush1.msra.mxu0 %v629
        %828 = vmatprep.subr.mxu0 0.0
        %829 = vmatpush1.msra.mxu0 %v630
        %830 = vmatprep.subr.mxu0 0.0
        %831 = vmatpush1.msra.mxu0 0.0
        %832 = vmatprep.subr.mxu0 0.0
        %833 = vmatpush1.msra.mxu0 0.0
        %834 = vmatprep.subr.mxu0 0.0
        %835 = vmatpush1.msra.mxu0 0.0
        %836 = vmatprep.subr.mxu0 0.0
        %837 = vmatpush1.msra.mxu0 0.0
        %838 = vmatprep.subr.mxu0 0.0
        %839 = vmatpush1.msra.mxu0 0.0
        %840 = vmatprep.subr.mxu0 0.0
        %841 = vmatpush1.msra.mxu0 0.0
        %842 = vmatprep.subr.mxu0 0.0
        %843 = vmatpush1.msra.mxu0 0.0
        %844 = vmatprep.subr.mxu0 0.0
        %845 = vmatpush1.msra.mxu0 0.0
        %846 = vmatprep.subr.mxu0 0.0
        %847 = vmatpush1.msra.mxu0 0.0
        %848 = vmatprep.subr.mxu0 0.0
        %849 = vmatpush1.msra.mxu0 0.0
        %850 = vmatprep.subr.mxu0 0.0
        %851 = vmatpush1.msra.mxu0 0.0
        %852 = vmatprep.subr.mxu0 0.0
        %853 = vmatpush1.msra.mxu0 0.0
        %854 = vmatprep.subr.mxu0 0.0
        %855 = vmatpush1.msra.mxu0 0.0
        %856 = vmatprep.subr.mxu0 0.0
        %857 = vmatpush1.msra.mxu0 0.0
        %858 = vmatprep.subr.mxu0 0.0
        %859 = vmatpush1.msra.mxu0 0.0
        %860 = vmatprep.subr.mxu0 0.0
        %861 = vmatpush1.msra.mxu0 0.0
        %862 = vmatprep.subr.mxu0 0.0
        %863 = vmatpush1.msra.mxu0 0.0
        %864 = vmatprep.subr.mxu0 0.0
        %865 = vmatpush1.msra.mxu0 0.0
        %866 = vmatprep.subr.mxu0 0.0
        %867 = vmatpush1.msra.mxu0 0.0
        %868 = vmatprep.subr.mxu0 0.0
        %869 = vmatpush1.msra.mxu0 0.0
        %870 = vmatprep.subr.mxu0 0.0
        %871 = vmatpush1.msra.mxu0 0.0
        %872 = vmatprep.subr.mxu0 0.0
        %873 = vmatpush1.msra.mxu0 0.0
        %874 = vmatprep.subr.mxu0 0.0
        %875 = vmatpush1.msra.mxu0 0.0
        %876 = vmatprep.subr.mxu0 0.0
        %877 = vmatpush1.msra.mxu0 0.0
        %878 = vmatprep.subr.mxu0 0.0
        %879 = vmatpush1.msra.mxu0 0.0
        %880 = vmatprep.subr.mxu0 0.0
        %881 = vmatpush1.msra.mxu0 0.0
        %882 = vmatprep.subr.mxu0 0.0
        %883 = vmatpush1.msra.mxu0 0.0
        %884 = vmatprep.subr.mxu0 0.0
        %885 = vmatpush1.msra.mxu0 0.0
        %886 = vmatprep.mubr.f32.mxu0 0.0
        %887 = vmatmul.mubr.f32.gmra.mrb[0].mxu0 %v820
        %v888 = vpop.f32.mrb[0].mxu0
        %v889 = vadd.f32 0.0, %v888
        %v890 = vpop.f32.mrb[0].mxu0
        %891 = vdwg.mxu0
        %v892 = vmul.f32 %v889, 0.00390625
        %v893 = vmul.f32 %v892, %v892
        %v895 = vrot.slane %v893, 7
        %v897 = vsub.f32 %v892, %v895
        %v898 = vadd.f32 %v897, 1e-05
        %v899 = vrsqrt.pop %v898
        %v900 = vsel %vm817, %v892, %v899
        %v902 = vsel %vm635, %v900, 0
        %904 = vmatprep.subr.mxu0 0.0
        %905 = vmatpush1.msra.mxu0 %v631
        %906 = vmatprep.subr.mxu0 0.0
        %907 = vmatpush1.msra.mxu0 %v632
        %908 = vmatprep.subr.mxu0 0.0
        %909 = vmatpush1.msra.mxu0 %v633
        %910 = vmatprep.subr.mxu0 0.0
        %911 = vmatpush1.msra.mxu0 %v634
        %912 = vmatprep.subr.mxu0 0.0
        %913 = vmatpush1.msra.mxu0 0.0
        %914 = vmatprep.subr.mxu0 0.0
        %915 = vmatpush1.msra.mxu0 0.0
        %916 = vmatprep.subr.mxu0 0.0
        %917 = vmatpush1.msra.mxu0 0.0
        %918 = vmatprep.subr.mxu0 0.0
        %919 = vmatpush1.msra.mxu0 0.0
        %920 = vmatprep.subr.mxu0 0.0
        %921 = vmatpush1.msra.mxu0 0.0
        %922 = vmatprep.subr.mxu0 0.0
        %923 = vmatpush1.msra.mxu0 0.0
        %924 = vmatprep.subr.mxu0 0.0
        %925 = vmatpush1.msra.mxu0 0.0
        %926 = vmatprep.subr.mxu0 0.0
        %927 = vmatpush1.msra.mxu0 0.0
        %928 = vmatprep.subr.mxu0 0.0
        %929 = vmatpush1.msra.mxu0 0.0
        %930 = vmatprep.subr.mxu0 0.0
        %931 = vmatpush1.msra.mxu0 0.0
        %932 = vmatprep.subr.mxu0 0.0
        %933 = vmatpush1.msra.mxu0 0.0
        %934 = vmatprep.subr.mxu0 0.0
        %935 = vmatpush1.msra.mxu0 0.0
        %936 = vmatprep.subr.mxu0 0.0
        %937 = vmatpush1.msra.mxu0 0.0
        %938 = vmatprep.subr.mxu0 0.0
        %939 = vmatpush1.msra.mxu0 0.0
        %940 = vmatprep.subr.mxu0 0.0
        %941 = vmatpush1.msra.mxu0 0.0
        %942 = vmatprep.subr.mxu0 0.0
        %943 = vmatpush1.msra.mxu0 0.0
        %944 = vmatprep.subr.mxu0 0.0
        %945 = vmatpush1.msra.mxu0 0.0
        %946 = vmatprep.subr.mxu0 0.0
        %947 = vmatpush1.msra.mxu0 0.0
        %948 = vmatprep.subr.mxu0 0.0
        %949 = vmatpush1.msra.mxu0 0.0
        %950 = vmatprep.subr.mxu0 0.0
        %951 = vmatpush1.msra.mxu0 0.0
        %952 = vmatprep.subr.mxu0 0.0
        %953 = vmatpush1.msra.mxu0 0.0
        %954 = vmatprep.subr.mxu0 0.0
        %955 = vmatpush1.msra.mxu0 0.0
        %956 = vmatprep.subr.mxu0 0.0
        %957 = vmatpush1.msra.mxu0 0.0
        %958 = vmatprep.subr.mxu0 0.0
        %959 = vmatpush1.msra.mxu0 0.0
        %960 = vmatprep.subr.mxu0 0.0
        %961 = vmatpush1.msra.mxu0 0.0
        %962 = vmatprep.subr.mxu0 0.0
        %963 = vmatpush1.msra.mxu0 0.0
        %964 = vmatprep.subr.mxu0 0.0
        %965 = vmatpush1.msra.mxu0 0.0
        %966 = vmatprep.subr.mxu0 0.0
        %967 = vmatpush1.msra.mxu0 0.0
        %968 = vmatprep.mubr.f32.mxu0 0.0
        %969 = vmatmul.mubr.f32.gmra.mrb[0].mxu0 %v902
        %v970 = vpop.f32.mrb[0].mxu0
        %v971 = vadd.f32 0.0, %v970
        %v972 = vpop.f32.mrb[0].mxu0
        %973 = vdwg.mxu0
        %v974 = vmul.f32 %v971, %v626
        %v975 = vsub.f32 %v626, %v971
        %v977 = vrot.slane %v974, 1
        %v979 = vmul.f32 %v975, %v977
        %v981 = vrot.slane %v979, 6
        %v983 = vadd.f32 %v626, %v981
        %v984 = vld [vmem:[%s5] sm:$0xff]
        %v985 = vld [vmem:[%s5 + $0x8] sm:$0xff]
        %v986 = vld [vmem:[%s5 + $0x10] sm:$0xff]
        %v987 = vld [vmem:[%s5 + $0x18] sm:$0xff]
        %v988 = vlaneseq
        %v989 = vshrl.u32 %v988, 7
        %v990 = vsub.s32 1, %v989
        %v991 = vrot.slane %v974, %v990
        %v992 = vmul.f32 %v468, %v991
        %v993 = vmul.f32 %v473, %v991
        %v994 = vmul.f32 %v478, %v991
        %v995 = vmul.f32 %v483, %v991
        %v996 = vmul.f32 %v488, %v991
        %v997 = vmul.f32 %v493, %v991
        %v998 = vmul.f32 %v498, %v991
        %v999 = vmul.f32 %v503, %v991
        %v1000 = vmul.f32 %v508, %v991
        %v1001 = vmul.f32 %v513, %v991
        %v1002 = vmul.f32 %v518, %v991
        %v1003 = vmul.f32 %v523, %v991
        %v1004 = vmul.f32 %v528, %v991
        %v1005 = vmul.f32 %v533, %v991
        %v1006 = vmul.f32 %v538, %v991
        %v1007 = vmul.f32 %v543, %v991
        %v1008 = vmul.f32 %v548, %v991
        %v1009 = vmul.f32 %v553, %v991
        %v1010 = vmul.f32 %v558, %v991
        %v1011 = vmul.f32 %v563, %v991
        %v1012 = vmul.f32 %v568, %v991
        %v1013 = vmul.f32 %v573, %v991
        %v1014 = vmul.f32 %v578, %v991
        %v1015 = vmul.f32 %v583, %v991
        %v1016 = vmul.f32 %v588, %v991
        %v1017 = vmul.f32 %v593, %v991
        %v1018 = vmul.f32 %v598, %v991
        %v1019 = vmul.f32 %v603, %v991
        %v1020 = vmul.f32 %v608, %v991
        %v1021 = vmul.f32 %v613, %v991
        %v1022 = vmul.f32 %v618, %v991
        %v1023 = vmul.f32 %v623, %v991
        %v1024 = vlaneseq
        %v1025 = vshrl.u32 %v1024, 7
        %v1026 = vsub.s32 2, %v1025
        %v1027 = vrot.slane %v983, %v1026
        %v1028 = vadd.f32 %v992, %v1027
        %v1029 = vadd.f32 %v993, %v1027
        %v1030 = vadd.f32 %v994, %v1027
        %v1031 = vadd.f32 %v995, %v1027
        %v1032 = vadd.f32 %v996, %v1027
        %v1033 = vadd.f32 %v997, %v1027
        %v1034 = vadd.f32 %v998, %v1027
        %v1035 = vadd.f32 %v999, %v1027
        %v1036 = vadd.f32 %v1000, %v1027
        %v1037 = vadd.f32 %v1001, %v1027
        %v1038 = vadd.f32 %v1002, %v1027
        %v1039 = vadd.f32 %v1003, %v1027
        %v1040 = vadd.f32 %v1004, %v1027
        %v1041 = vadd.f32 %v1005, %v1027
        %v1042 = vadd.f32 %v1006, %v1027
        %v1043 = vadd.f32 %v1007, %v1027
        %v1044 = vadd.f32 %v1008, %v1027
        %v1045 = vadd.f32 %v1009, %v1027
        %v1046 = vadd.f32 %v1010, %v1027
        %v1047 = vadd.f32 %v1011, %v1027
        %v1048 = vadd.f32 %v1012, %v1027
        %v1049 = vadd.f32 %v1013, %v1027
        %v1050 = vadd.f32 %v1014, %v1027
        %v1051 = vadd.f32 %v1015, %v1027
        %v1052 = vadd.f32 %v1016, %v1027
        %v1053 = vadd.f32 %v1017, %v1027
        %v1054 = vadd.f32 %v1018, %v1027
        %v1055 = vadd.f32 %v1019, %v1027
        %v1056 = vadd.f32 %v1020, %v1027
        %v1057 = vadd.f32 %v1021, %v1027
        %v1058 = vadd.f32 %v1022, %v1027
        %v1059 = vadd.f32 %v1023, %v1027
        %v1060 = vmax.f32 %v1028, 0.0
        %v1061 = vmax.f32 %v1029, 0.0
        %v1062 = vmax.f32 %v1030, 0.0
        %v1063 = vmax.f32 %v1031, 0.0
        %v1064 = vmax.f32 %v1032, 0.0
        %v1065 = vmax.f32 %v1033, 0.0
        %v1066 = vmax.f32 %v1034, 0.0
        %v1067 = vmax.f32 %v1035, 0.0
        %v1068 = vmax.f32 %v1036, 0.0
        %v1069 = vmax.f32 %v1037, 0.0
        %v1070 = vmax.f32 %v1038, 0.0
        %v1071 = vmax.f32 %v1039, 0.0
        %v1072 = vmax.f32 %v1040, 0.0
        %v1073 = vmax.f32 %v1041, 0.0
        %v1074 = vmax.f32 %v1042, 0.0
        %v1075 = vmax.f32 %v1043, 0.0
        %v1076 = vmax.f32 %v1044, 0.0
        %v1077 = vmax.f32 %v1045, 0.0
        %v1078 = vmax.f32 %v1046, 0.0
        %v1079 = vmax.f32 %v1047, 0.0
        %v1080 = vmax.f32 %v1048, 0.0
        %v1081 = vmax.f32 %v1049, 0.0
        %v1082 = vmax.f32 %v1050, 0.0
        %v1083 = vmax.f32 %v1051, 0.0
        %v1084 = vmax.f32 %v1052, 0.0
        %v1085 = vmax.f32 %v1053, 0.0
        %v1086 = vmax.f32 %v1054, 0.0
        %v1087 = vmax.f32 %v1055, 0.0
        %v1088 = vmax.f32 %v1056, 0.0
        %v1089 = vmax.f32 %v1057, 0.0
        %v1090 = vmax.f32 %v1058, 0.0
        %v1091 = vmax.f32 %v1059, 0.0
        %v1093 = vsel %vm635, %v1060, 0
        %v1096 = vsel %vm635, %v1061, 0
        %v1099 = vsel %vm635, %v1062, 0
        %v1102 = vsel %vm635, %v1063, 0
        %v1105 = vsel %vm635, %v1064, 0
        %v1108 = vsel %vm635, %v1065, 0
        %v1111 = vsel %vm635, %v1066, 0
        %v1114 = vsel %vm635, %v1067, 0
        %v1117 = vsel %vm635, %v1068, 0
        %v1120 = vsel %vm635, %v1069, 0
        %v1123 = vsel %vm635, %v1070, 0
        %v1126 = vsel %vm635, %v1071, 0
        %v1129 = vsel %vm635, %v1072, 0
        %v1132 = vsel %vm635, %v1073, 0
        %v1135 = vsel %vm635, %v1074, 0
        %v1138 = vsel %vm635, %v1075, 0
        %v1141 = vsel %vm635, %v1076, 0
        %v1144 = vsel %vm635, %v1077, 0
        %v1147 = vsel %vm635, %v1078, 0
        %v1150 = vsel %vm635, %v1079, 0
        %v1153 = vsel %vm635, %v1080, 0
        %v1156 = vsel %vm635, %v1081, 0
        %v1159 = vsel %vm635, %v1082, 0
        %v1162 = vsel %vm635, %v1083, 0
        %v1165 = vsel %vm635, %v1084, 0
        %v1168 = vsel %vm635, %v1085, 0
        %v1171 = vsel %vm635, %v1086, 0
        %v1174 = vsel %vm635, %v1087, 0
        %v1177 = vsel %vm635, %v1088, 0
        %v1180 = vsel %vm635, %v1089, 0
        %v1183 = vsel %vm635, %v1090, 0
        %v1186 = vsel %vm635, %v1091, 0
        %1188 = vmatprep.subr.mxu0 0.0
        %1189 = vmatpush1.msra.mxu0 %v984
        %1190 = vmatprep.subr.mxu0 0.0
        %1191 = vmatpush1.msra.mxu0 %v985
        %1192 = vmatprep.subr.mxu0 0.0
        %1193 = vmatpush1.msra.mxu0 %v986
        %1194 = vmatprep.subr.mxu0 0.0
        %1195 = vmatpush1.msra.mxu0 %v987
        %1196 = vmatprep.subr.mxu0 0.0
        %1197 = vmatpush1.msra.mxu0 0.0
        %1198 = vmatprep.subr.mxu0 0.0
        %1199 = vmatpush1.msra.mxu0 0.0
        %1200 = vmatprep.subr.mxu0 0.0
        %1201 = vmatpush1.msra.mxu0 0.0
        %1202 = vmatprep.subr.mxu0 0.0
        %1203 = vmatpush1.msra.mxu0 0.0
        %1204 = vmatprep.subr.mxu0 0.0
        %1205 = vmatpush1.msra.mxu0 0.0
        %1206 = vmatprep.subr.mxu0 0.0
        %1207 = vmatpush1.msra.mxu0 0.0
        %1208 = vmatprep.subr.mxu0 0.0
        %1209 = vmatpush1.msra.mxu0 0.0
        %1210 = vmatprep.subr.mxu0 0.0
        %1211 = vmatpush1.msra.mxu0 0.0
        %1212 = vmatprep.subr.mxu0 0.0
        %1213 = vmatpush1.msra.mxu0 0.0
        %1214 = vmatprep.subr.mxu0 0.0
        %1215 = vmatpush1.msra.mxu0 0.0
        %1216 = vmatprep.subr.mxu0 0.0
        %1217 = vmatpush1.msra.mxu0 0.0
        %1218 = vmatprep.subr.mxu0 0.0
        %1219 = vmatpush1.msra.mxu0 0.0
        %1220 = vmatprep.subr.mxu0 0.0
        %1221 = vmatpush1.msra.mxu0 0.0
        %1222 = vmatprep.subr.mxu0 0.0
        %1223 = vmatpush1.msra.mxu0 0.0
        %1224 = vmatprep.subr.mxu0 0.0
        %1225 = vmatpush1.msra.mxu0 0.0
        %1226 = vmatprep.subr.mxu0 0.0
        %1227 = vmatpush1.msra.mxu0 0.0
        %1228 = vmatprep.subr.mxu0 0.0
        %1229 = vmatpush1.msra.mxu0 0.0
        %1230 = vmatprep.subr.mxu0 0.0
        %1231 = vmatpush1.msra.mxu0 0.0
        %1232 = vmatprep.subr.mxu0 0.0
        %1233 = vmatpush1.msra.mxu0 0.0
        %1234 = vmatprep.subr.mxu0 0.0
        %1235 = vmatpush1.msra.mxu0 0.0
        %1236 = vmatprep.subr.mxu0 0.0
        %1237 = vmatpush1.msra.mxu0 0.0
        %1238 = vmatprep.subr.mxu0 0.0
        %1239 = vmatpush1.msra.mxu0 0.0
        %1240 = vmatprep.subr.mxu0 0.0
        %1241 = vmatpush1.msra.mxu0 0.0
        %1242 = vmatprep.subr.mxu0 0.0
        %1243 = vmatpush1.msra.mxu0 0.0
        %1244 = vmatprep.subr.mxu0 0.0
        %1245 = vmatpush1.msra.mxu0 0.0
        %1246 = vmatprep.subr.mxu0 0.0
        %1247 = vmatpush1.msra.mxu0 0.0
        %1248 = vmatprep.subr.mxu0 0.0
        %1249 = vmatpush1.msra.mxu0 0.0
        %1250 = vmatprep.subr.mxu0 0.0
        %1251 = vmatpush1.msra.mxu0 0.0
        %1252 = vmatprep.mubr.f32.mxu0 0.0
        %1253 = vmatmul.mubr.f32.gmra.mrb[0].mxu0 %v1093
        %v1254 = vpop.f32.mrb[0].mxu0
        %v1255 = vadd.f32 0.0, %v1254
        %v1256 = vpop.f32.mrb[0].mxu0
        %1257 = vmatprep.mubr.f32.mxu0 0.0
        %1258 = vmatmul.mubr.f32.gmra.mrb[0].mxu0 %v1096
        %v1259 = vpop.f32.mrb[0].mxu0
        %v1260 = vadd.f32 0.0, %v1259
        %v1261 = vpop.f32.mrb[0].mxu0
        %1262 = vmatprep.mubr.f32.mxu0 0.0
        %1263 = vmatmul.mubr.f32.gmra.mrb[0].mxu0 %v1099
        %v1264 = vpop.f32.mrb[0].mxu0
        %v1265 = vadd.f32 0.0, %v1264
        %v1266 = vpop.f32.mrb[0].mxu0
        %1267 = vmatprep.mubr.f32.mxu0 0.0
        %1268 = vmatmul.mubr.f32.gmra.mrb[0].mxu0 %v1102
        %v1269 = vpop.f32.mrb[0].mxu0
        %v1270 = vadd.f32 0.0, %v1269
        %v1271 = vpop.f32.mrb[0].mxu0
        %1272 = vmatprep.mubr.f32.mxu0 0.0
        %1273 = vmatmul.mubr.f32.gmra.mrb[0].mxu0 %v1105
        %v1274 = vpop.f32.mrb[0].mxu0
        %v1275 = vadd.f32 0.0, %v1274
        %v1276 = vpop.f32.mrb[0].mxu0
        %1277 = vmatprep.mubr.f32.mxu0 0.0
        %1278 = vmatmul.mubr.f32.gmra.mrb[0].mxu0 %v1108
        %v1279 = vpop.f32.mrb[0].mxu0
        %v1280 = vadd.f32 0.0, %v1279
        %v1281 = vpop.f32.mrb[0].mxu0
        %1282 = vmatprep.mubr.f32.mxu0 0.0
        %1283 = vmatmul.mubr.f32.gmra.mrb[0].mxu0 %v1111
        %v1284 = vpop.f32.mrb[0].mxu0
        %v1285 = vadd.f32 0.0, %v1284
        %v1286 = vpop.f32.mrb[0].mxu0
        %1287 = vmatprep.mubr.f32.mxu0 0.0
        %1288 = vmatmul.mubr.f32.gmra.mrb[0].mxu0 %v1114
        %v1289 = vpop.f32.mrb[0].mxu0
        %v1290 = vadd.f32 0.0, %v1289
        %v1291 = vpop.f32.mrb[0].mxu0
        %1292 = vmatprep.mubr.f32.mxu0 0.0
        %1293 = vmatmul.mubr.f32.gmra.mrb[0].mxu0 %v1117
        %v1294 = vpop.f32.mrb[0].mxu0
        %v1295 = vadd.f32 0.0, %v1294
        %v1296 = vpop.f32.mrb[0].mxu0
        %1297 = vmatprep.mubr.f32.mxu0 0.0
        %1298 = vmatmul.mubr.f32.gmra.mrb[0].mxu0 %v1120
        %v1299 = vpop.f32.mrb[0].mxu0
        %v1300 = vadd.f32 0.0, %v1299
        %v1301 = vpop.f32.mrb[0].mxu0
        %1302 = vmatprep.mubr.f32.mxu0 0.0
        %1303 = vmatmul.mubr.f32.gmra.mrb[0].mxu0 %v1123
        %v1304 = vpop.f32.mrb[0].mxu0
        %v1305 = vadd.f32 0.0, %v1304
        %v1306 = vpop.f32.mrb[0].mxu0
        %1307 = vmatprep.mubr.f32.mxu0 0.0
        %1308 = vmatmul.mubr.f32.gmra.mrb[0].mxu0 %v1126
        %v1309 = vpop.f32.mrb[0].mxu0
        %v1310 = vadd.f32 0.0, %v1309
        %v1311 = vpop.f32.mrb[0].mxu0
        %1312 = vmatprep.mubr.f32.mxu0 0.0
        %1313 = vmatmul.mubr.f32.gmra.mrb[0].mxu0 %v1129
        %v1314 = vpop.f32.mrb[0].mxu0
        %v1315 = vadd.f32 0.0, %v1314
        %v1316 = vpop.f32.mrb[0].mxu0
        %1317 = vmatprep.mubr.f32.mxu0 0.0
        %1318 = vmatmul.mubr.f32.gmra.mrb[0].mxu0 %v1132
        %v1319 = vpop.f32.mrb[0].mxu0
        %v1320 = vadd.f32 0.0, %v1319
        %v1321 = vpop.f32.mrb[0].mxu0
        %1322 = vmatprep.mubr.f32.mxu0 0.0
        %1323 = vmatmul.mubr.f32.gmra.mrb[0].mxu0 %v1135
        %v1324 = vpop.f32.mrb[0].mxu0
        %v1325 = vadd.f32 0.0, %v1324
        %v1326 = vpop.f32.mrb[0].mxu0
        %1327 = vmatprep.mubr.f32.mxu0 0.0
        %1328 = vmatmul.mubr.f32.gmra.mrb[0].mxu0 %v1138
        %v1329 = vpop.f32.mrb[0].mxu0
        %v1330 = vadd.f32 0.0, %v1329
        %v1331 = vpop.f32.mrb[0].mxu0
        %1332 = vmatprep.mubr.f32.mxu0 0.0
        %1333 = vmatmul.mubr.f32.gmra.mrb[0].mxu0 %v1141
        %v1334 = vpop.f32.mrb[0].mxu0
        %v1335 = vadd.f32 0.0, %v1334
        %v1336 = vpop.f32.mrb[0].mxu0
        %1337 = vmatprep.mubr.f32.mxu0 0.0
        %1338 = vmatmul.mubr.f32.gmra.mrb[0].mxu0 %v1144
        %v1339 = vpop.f32.mrb[0].mxu0
        %v1340 = vadd.f32 0.0, %v1339
        %v1341 = vpop.f32.mrb[0].mxu0
        %1342 = vmatprep.mubr.f32.mxu0 0.0
        %1343 = vmatmul.mubr.f32.gmra.mrb[0].mxu0 %v1147
        %v1344 = vpop.f32.mrb[0].mxu0
        %v1345 = vadd.f32 0.0, %v1344
        %v1346 = vpop.f32.mrb[0].mxu0
        %1347 = vmatprep.mubr.f32.mxu0 0.0
        %1348 = vmatmul.mubr.f32.gmra.mrb[0].mxu0 %v1150
        %v1349 = vpop.f32.mrb[0].mxu0
        %v1350 = vadd.f32 0.0, %v1349
        %v1351 = vpop.f32.mrb[0].mxu0
        %1352 = vmatprep.mubr.f32.mxu0 0.0
        %1353 = vmatmul.mubr.f32.gmra.mrb[0].mxu0 %v1153
        %v1354 = vpop.f32.mrb[0].mxu0
        %v1355 = vadd.f32 0.0, %v1354
        %v1356 = vpop.f32.mrb[0].mxu0
        %1357 = vmatprep.mubr.f32.mxu0 0.0
        %1358 = vmatmul.mubr.f32.gmra.mrb[0].mxu0 %v1156
        %v1359 = vpop.f32.mrb[0].mxu0
        %v1360 = vadd.f32 0.0, %v1359
        %v1361 = vpop.f32.mrb[0].mxu0
        %1362 = vmatprep.mubr.f32.mxu0 0.0
        %1363 = vmatmul.mubr.f32.gmra.mrb[0].mxu0 %v1159
        %v1364 = vpop.f32.mrb[0].mxu0
        %v1365 = vadd.f32 0.0, %v1364
        %v1366 = vpop.f32.mrb[0].mxu0
        %1367 = vmatprep.mubr.f32.mxu0 0.0
        %1368 = vmatmul.mubr.f32.gmra.mrb[0].mxu0 %v1162
        %v1369 = vpop.f32.mrb[0].mxu0
        %v1370 = vadd.f32 0.0, %v1369
        %v1371 = vpop.f32.mrb[0].mxu0
        %1372 = vmatprep.mubr.f32.mxu0 0.0
        %1373 = vmatmul.mubr.f32.gmra.mrb[0].mxu0 %v1165
        %v1374 = vpop.f32.mrb[0].mxu0
        %v1375 = vadd.f32 0.0, %v1374
        %v1376 = vpop.f32.mrb[0].mxu0
        %1377 = vmatprep.mubr.f32.mxu0 0.0
        %1378 = vmatmul.mubr.f32.gmra.mrb[0].mxu0 %v1168
        %v1379 = vpop.f32.mrb[0].mxu0
        %v1380 = vadd.f32 0.0, %v1379
        %v1381 = vpop.f32.mrb[0].mxu0
        %1382 = vmatprep.mubr.f32.mxu0 0.0
        %1383 = vmatmul.mubr.f32.gmra.mrb[0].mxu0 %v1171
        %v1384 = vpop.f32.mrb[0].mxu0
        %v1385 = vadd.f32 0.0, %v1384
        %v1386 = vpop.f32.mrb[0].mxu0
        %1387 = vmatprep.mubr.f32.mxu0 0.0
        %1388 = vmatmul.mubr.f32.gmra.mrb[0].mxu0 %v1174
        %v1389 = vpop.f32.mrb[0].mxu0
        %v1390 = vadd.f32 0.0, %v1389
        %v1391 = vpop.f32.mrb[0].mxu0
        %1392 = vmatprep.mubr.f32.mxu0 0.0
        %1393 = vmatmul.mubr.f32.gmra.mrb[0].mxu0 %v1177
        %v1394 = vpop.f32.mrb[0].mxu0
        %v1395 = vadd.f32 0.0, %v1394
        %v1396 = vpop.f32.mrb[0].mxu0
        %1397 = vmatprep.mubr.f32.mxu0 0.0
        %1398 = vmatmul.mubr.f32.gmra.mrb[0].mxu0 %v1180
        %v1399 = vpop.f32.mrb[0].mxu0
        %v1400 = vadd.f32 0.0, %v1399
        %v1401 = vpop.f32.mrb[0].mxu0
        %1402 = vmatprep.mubr.f32.mxu0 0.0
        %1403 = vmatmul.mubr.f32.gmra.mrb[0].mxu0 %v1183
        %v1404 = vpop.f32.mrb[0].mxu0
        %v1405 = vadd.f32 0.0, %v1404
        %v1406 = vpop.f32.mrb[0].mxu0
        %1407 = vmatprep.mubr.f32.mxu0 0.0
        %1408 = vmatmul.mubr.f32.gmra.mrb[0].mxu0 %v1186
        %v1409 = vpop.f32.mrb[0].mxu0
        %v1410 = vadd.f32 0.0, %v1409
        %v1411 = vpop.f32.mrb[0].mxu0
        %1412 = vdwg.mxu0
        %v1413 = vld [vmem:[%s6] sm:$0x7]
        %v1414 = vld [vmem:[%s7] sm:$0xff]
        %v1415 = vld [vmem:[%s7 + $0x8] sm:$0xff]
        %v1416 = vld [vmem:[%s7 + $0x10] sm:$0xff]
        %v1417 = vld [vmem:[%s7 + $0x18] sm:$0xff]
        %v1418 = vld [vmem:[%s7 + $0x20] sm:$0xff]
        %v1419 = vld [vmem:[%s7 + $0x28] sm:$0xff]
        %v1420 = vld [vmem:[%s7 + $0x30] sm:$0xff]
        %v1421 = vld [vmem:[%s7 + $0x38] sm:$0xff]
        %v1422 = vld [vmem:[%s7 + $0x40] sm:$0xff]
        %v1423 = vld [vmem:[%s7 + $0x48] sm:$0xff]
        %v1424 = vld [vmem:[%s7 + $0x50] sm:$0xff]
        %v1425 = vld [vmem:[%s7 + $0x58] sm:$0xff]
        %v1426 = vld [vmem:[%s7 + $0x60] sm:$0xff]
        %v1427 = vld [vmem:[%s7 + $0x68] sm:$0xff]
        %v1428 = vld [vmem:[%s7 + $0x70] sm:$0xff]
        %v1429 = vld [vmem:[%s7 + $0x78] sm:$0xff]
        %v1430 = vld [vmem:[%s8] sm:$0xff]
        %v1431 = vld [vmem:[%s8 + $0x8] sm:$0xff]
        %v1432 = vld [vmem:[%s8 + $0x10] sm:$0xff]
        %v1433 = vld [vmem:[%s8 + $0x18] sm:$0xff]
        %v1434 = vadd.f32 %v1255, %v1260
        %v1435 = vadd.f32 %v1434, %v1265
        %v1436 = vadd.f32 %v1435, %v1270
        %v1437 = vadd.f32 %v1436, %v1275
        %v1438 = vadd.f32 %v1437, %v1280
        %v1439 = vadd.f32 %v1438, %v1285
        %v1440 = vadd.f32 %v1439, %v1290
        %v1441 = vadd.f32 %v1440, %v1295
        %v1442 = vadd.f32 %v1441, %v1300
        %v1443 = vadd.f32 %v1442, %v1305
        %v1444 = vadd.f32 %v1443, %v1310
        %v1445 = vadd.f32 %v1444, %v1315
        %v1446 = vadd.f32 %v1445, %v1320
        %v1447 = vadd.f32 %v1446, %v1325
        %v1448 = vadd.f32 %v1447, %v1330
        %v1449 = vadd.f32 %v1448, %v1335
        %v1450 = vadd.f32 %v1449, %v1340
        %v1451 = vadd.f32 %v1450, %v1345
        %v1452 = vadd.f32 %v1451, %v1350
        %v1453 = vadd.f32 %v1452, %v1355
        %v1454 = vadd.f32 %v1453, %v1360
        %v1455 = vadd.f32 %v1454, %v1365
        %v1456 = vadd.f32 %v1455, %v1370
        %v1457 = vadd.f32 %v1456, %v1375
        %v1458 = vadd.f32 %v1457, %v1380
        %v1459 = vadd.f32 %v1458, %v1385
        %v1460 = vadd.f32 %v1459, %v1390
        %v1461 = vadd.f32 %v1460, %v1395
        %v1462 = vadd.f32 %v1461, %v1400
        %v1463 = vadd.f32 %v1462, %v1405
        %v1464 = vadd.f32 %v1463, %v1410
        %v1465 = vrot.slane %v1464, 4
        %v1466 = vadd.f32 %v1464, %v1465
        %v1467 = vrot.slane %v1466, 2
        %v1468 = vadd.f32 %v1466, %v1467
        %v1469 = vrot.slane %v1468, 1
        %v1470 = vadd.f32 %v1468, %v1469
        %v1471 = vmul.f32 %v1255, %v1255
        %v1472 = vmul.f32 %v1260, %v1260
        %v1473 = vmul.f32 %v1265, %v1265
        %v1474 = vmul.f32 %v1270, %v1270
        %v1475 = vmul.f32 %v1275, %v1275
        %v1476 = vmul.f32 %v1280, %v1280
        %v1477 = vmul.f32 %v1285, %v1285
        %v1478 = vmul.f32 %v1290, %v1290
        %v1479 = vmul.f32 %v1295, %v1295
        %v1480 = vmul.f32 %v1300, %v1300
        %v1481 = vmul.f32 %v1305, %v1305
        %v1482 = vmul.f32 %v1310, %v1310
        %v1483 = vmul.f32 %v1315, %v1315
        %v1484 = vmul.f32 %v1320, %v1320
        %v1485 = vmul.f32 %v1325, %v1325
        %v1486 = vmul.f32 %v1330, %v1330
        %v1487 = vmul.f32 %v1335, %v1335
        %v1488 = vmul.f32 %v1340, %v1340
        %v1489 = vmul.f32 %v1345, %v1345
        %v1490 = vmul.f32 %v1350, %v1350
        %v1491 = vmul.f32 %v1355, %v1355
        %v1492 = vmul.f32 %v1360, %v1360
        %v1493 = vmul.f32 %v1365, %v1365
        %v1494 = vmul.f32 %v1370, %v1370
        %v1495 = vmul.f32 %v1375, %v1375
        %v1496 = vmul.f32 %v1380, %v1380
        %v1497 = vmul.f32 %v1385, %v1385
        %v1498 = vmul.f32 %v1390, %v1390
        %v1499 = vmul.f32 %v1395, %v1395
        %v1500 = vmul.f32 %v1400, %v1400
        %v1501 = vmul.f32 %v1405, %v1405
        %v1502 = vmul.f32 %v1410, %v1410
        %v1503 = vadd.f32 %v1471, %v1472
        %v1504 = vadd.f32 %v1503, %v1473
        %v1505 = vadd.f32 %v1504, %v1474
        %v1506 = vadd.f32 %v1505, %v1475
        %v1507 = vadd.f32 %v1506, %v1476
        %v1508 = vadd.f32 %v1507, %v1477
        %v1509 = vadd.f32 %v1508, %v1478
        %v1510 = vadd.f32 %v1509, %v1479
        %v1511 = vadd.f32 %v1510, %v1480
        %v1512 = vadd.f32 %v1511, %v1481
        %v1513 = vadd.f32 %v1512, %v1482
        %v1514 = vadd.f32 %v1513, %v1483
        %v1515 = vadd.f32 %v1514, %v1484
        %v1516 = vadd.f32 %v1515, %v1485
        %v1517 = vadd.f32 %v1516, %v1486
        %v1518 = vadd.f32 %v1517, %v1487
        %v1519 = vadd.f32 %v1518, %v1488
        %v1520 = vadd.f32 %v1519, %v1489
        %v1521 = vadd.f32 %v1520, %v1490
        %v1522 = vadd.f32 %v1521, %v1491
        %v1523 = vadd.f32 %v1522, %v1492
        %v1524 = vadd.f32 %v1523, %v1493
        %v1525 = vadd.f32 %v1524, %v1494
        %v1526 = vadd.f32 %v1525, %v1495
        %v1527 = vadd.f32 %v1526, %v1496
        %v1528 = vadd.f32 %v1527, %v1497
        %v1529 = vadd.f32 %v1528, %v1498
        %v1530 = vadd.f32 %v1529, %v1499
        %v1531 = vadd.f32 %v1530, %v1500
        %v1532 = vadd.f32 %v1531, %v1501
        %v1533 = vadd.f32 %v1532, %v1502
        %v1534 = vrot.slane %v1533, 4
        %v1535 = vadd.f32 %v1533, %v1534
        %v1536 = vrot.slane %v1535, 2
        %v1537 = vadd.f32 %v1535, %v1536
        %v1538 = vrot.slane %v1537, 1
        %v1539 = vadd.f32 %v1537, %v1538
        %v1540 = vmul.f32 %v1413, 256.0
        %v1541 = vadd.f32 %v1470, %v1540
        %v1542 = vmul.f32 %v1413, 2.0
        %v1543 = vmul.f32 %v1542, %v1470
        %v1544 = vadd.f32 %v1539, %v1543
        %v1545 = vmul.f32 %v1413, %v1413
        %v1546 = vmul.f32 %v1545, 256.0
        %v1547 = vadd.f32 %v1544, %v1546
        %v1549 = vrot.slane %v1547, 7
        %v1551 = vsel %vm817, %v1541, %v1549
        %1552 = vmatprep.subr.mxu0 0.0
        %1553 = vmatpush1.msra.mxu0 %v1414
        %1554 = vmatprep.subr.mxu0 0.0
        %1555 = vmatpush1.msra.mxu0 %v1415
        %1556 = vmatprep.subr.mxu0 0.0
        %1557 = vmatpush1.msra.mxu0 %v1416
        %1558 = vmatprep.subr.mxu0 0.0
        %1559 = vmatpush1.msra.mxu0 %v1417
        %1560 = vmatprep.subr.mxu0 0.0
        %1561 = vmatpush1.msra.mxu0 %v1418
        %1562 = vmatprep.subr.mxu0 0.0
        %1563 = vmatpush1.msra.mxu0 %v1419
        %1564 = vmatprep.subr.mxu0 0.0
        %1565 = vmatpush1.msra.mxu0 %v1420
        %1566 = vmatprep.subr.mxu0 0.0
        %1567 = vmatpush1.msra.mxu0 %v1421
        %1568 = vmatprep.subr.mxu0 0.0
        %1569 = vmatpush1.msra.mxu0 %v1422
        %1570 = vmatprep.subr.mxu0 0.0
        %1571 = vmatpush1.msra.mxu0 %v1423
        %1572 = vmatprep.subr.mxu0 0.0
        %1573 = vmatpush1.msra.mxu0 %v1424
        %1574 = vmatprep.subr.mxu0 0.0
        %1575 = vmatpush1.msra.mxu0 %v1425
        %1576 = vmatprep.subr.mxu0 0.0
        %1577 = vmatpush1.msra.mxu0 %v1426
        %1578 = vmatprep.subr.mxu0 0.0
        %1579 = vmatpush1.msra.mxu0 %v1427
        %1580 = vmatprep.subr.mxu0 0.0
        %1581 = vmatpush1.msra.mxu0 %v1428
        %1582 = vmatprep.subr.mxu0 0.0
        %1583 = vmatpush1.msra.mxu0 %v1429
        %1584 = vmatprep.subr.mxu0 0.0
        %1585 = vmatpush1.msra.mxu0 0.0
        %1586 = vmatprep.subr.mxu0 0.0
        %1587 = vmatpush1.msra.mxu0 0.0
        %1588 = vmatprep.subr.mxu0 0.0
        %1589 = vmatpush1.msra.mxu0 0.0
        %1590 = vmatprep.subr.mxu0 0.0
        %1591 = vmatpush1.msra.mxu0 0.0
        %1592 = vmatprep.subr.mxu0 0.0
        %1593 = vmatpush1.msra.mxu0 0.0
        %1594 = vmatprep.subr.mxu0 0.0
        %1595 = vmatpush1.msra.mxu0 0.0
        %1596 = vmatprep.subr.mxu0 0.0
        %1597 = vmatpush1.msra.mxu0 0.0
        %1598 = vmatprep.subr.mxu0 0.0
        %1599 = vmatpush1.msra.mxu0 0.0
        %1600 = vmatprep.subr.mxu0 0.0
        %1601 = vmatpush1.msra.mxu0 0.0
        %1602 = vmatprep.subr.mxu0 0.0
        %1603 = vmatpush1.msra.mxu0 0.0
        %1604 = vmatprep.subr.mxu0 0.0
        %1605 = vmatpush1.msra.mxu0 0.0
        %1606 = vmatprep.subr.mxu0 0.0
        %1607 = vmatpush1.msra.mxu0 0.0
        %1608 = vmatprep.subr.mxu0 0.0
        %1609 = vmatpush1.msra.mxu0 0.0
        %1610 = vmatprep.subr.mxu0 0.0
        %1611 = vmatpush1.msra.mxu0 0.0
        %1612 = vmatprep.subr.mxu0 0.0
        %1613 = vmatpush1.msra.mxu0 0.0
        %1614 = vmatprep.subr.mxu0 0.0
        %1615 = vmatpush1.msra.mxu0 0.0
        %1616 = vmatprep.mubr.f32.mxu0 0.0
        %1617 = vmatmul.mubr.f32.gmra.mrb[0].mxu0 %v1551
        %v1618 = vpop.f32.mrb[0].mxu0
        %v1619 = vadd.f32 0.0, %v1618
        %v1620 = vpop.f32.mrb[0].mxu0
        %1621 = vdwg.mxu0
        %v1622 = vmul.f32 %v1619, 0.0009765625
        %v1623 = vmul.f32 %v1622, %v1622
        %v1625 = vrot.slane %v1623, 7
        %v1627 = vsub.f32 %v1622, %v1625
        %v1628 = vadd.f32 %v1627, 1e-05
        %v1629 = vrsqrt.pop %v1628
        %v1630 = vsel %vm817, %v1622, %v1629
        %v1632 = vsel %vm635, %v1630, 0
        %1634 = vmatprep.subr.mxu0 0.0
        %1635 = vmatpush1.msra.mxu0 %v1430
        %1636 = vmatprep.subr.mxu0 0.0
        %1637 = vmatpush1.msra.mxu0 %v1431
        %1638 = vmatprep.subr.mxu0 0.0
        %1639 = vmatpush1.msra.mxu0 %v1432
        %1640 = vmatprep.subr.mxu0 0.0
        %1641 = vmatpush1.msra.mxu0 %v1433
        %1642 = vmatprep.subr.mxu0 0.0
        %1643 = vmatpush1.msra.mxu0 0.0
        %1644 = vmatprep.subr.mxu0 0.0
        %1645 = vmatpush1.msra.mxu0 0.0
        %1646 = vmatprep.subr.mxu0 0.0
        %1647 = vmatpush1.msra.mxu0 0.0
        %1648 = vmatprep.subr.mxu0 0.0
        %1649 = vmatpush1.msra.mxu0 0.0
        %1650 = vmatprep.subr.mxu0 0.0
        %1651 = vmatpush1.msra.mxu0 0.0
        %1652 = vmatprep.subr.mxu0 0.0
        %1653 = vmatpush1.msra.mxu0 0.0
        %1654 = vmatprep.subr.mxu0 0.0
        %1655 = vmatpush1.msra.mxu0 0.0
        %1656 = vmatprep.subr.mxu0 0.0
        %1657 = vmatpush1.msra.mxu0 0.0
        %1658 = vmatprep.subr.mxu0 0.0
        %1659 = vmatpush1.msra.mxu0 0.0
        %1660 = vmatprep.subr.mxu0 0.0
        %1661 = vmatpush1.msra.mxu0 0.0
        %1662 = vmatprep.subr.mxu0 0.0
        %1663 = vmatpush1.msra.mxu0 0.0
        %1664 = vmatprep.subr.mxu0 0.0
        %1665 = vmatpush1.msra.mxu0 0.0
        %1666 = vmatprep.subr.mxu0 0.0
        %1667 = vmatpush1.msra.mxu0 0.0
        %1668 = vmatprep.subr.mxu0 0.0
        %1669 = vmatpush1.msra.mxu0 0.0
        %1670 = vmatprep.subr.mxu0 0.0
        %1671 = vmatpush1.msra.mxu0 0.0
        %1672 = vmatprep.subr.mxu0 0.0
        %1673 = vmatpush1.msra.mxu0 0.0
        %1674 = vmatprep.subr.mxu0 0.0
        %1675 = vmatpush1.msra.mxu0 0.0
        %1676 = vmatprep.subr.mxu0 0.0
        %1677 = vmatpush1.msra.mxu0 0.0
        %1678 = vmatprep.subr.mxu0 0.0
        %1679 = vmatpush1.msra.mxu0 0.0
        %1680 = vmatprep.subr.mxu0 0.0
        %1681 = vmatpush1.msra.mxu0 0.0
        %1682 = vmatprep.subr.mxu0 0.0
        %1683 = vmatpush1.msra.mxu0 0.0
        %1684 = vmatprep.subr.mxu0 0.0
        %1685 = vmatpush1.msra.mxu0 0.0
        %1686 = vmatprep.subr.mxu0 0.0
        %1687 = vmatpush1.msra.mxu0 0.0
        %1688 = vmatprep.subr.mxu0 0.0
        %1689 = vmatpush1.msra.mxu0 0.0
        %1690 = vmatprep.subr.mxu0 0.0
        %1691 = vmatpush1.msra.mxu0 0.0
        %1692 = vmatprep.subr.mxu0 0.0
        %1693 = vmatpush1.msra.mxu0 0.0
        %1694 = vmatprep.subr.mxu0 0.0
        %1695 = vmatpush1.msra.mxu0 0.0
        %1696 = vmatprep.subr.mxu0 0.0
        %1697 = vmatpush1.msra.mxu0 0.0
        %1698 = vmatprep.mubr.f32.mxu0 0.0
        %1699 = vmatmul.mubr.f32.gmra.mrb[0].mxu0 %v1632
        %v1700 = vpop.f32.mrb[0].mxu0
        %v1701 = vadd.f32 0.0, %v1700
        %v1702 = vpop.f32.mrb[0].mxu0
        %1703 = vdwg.mxu0
        %v1704 = vmul.f32 %v1701, %v1413
        %v1705 = vsub.f32 %v1413, %v1701
        %v1707 = vrot.slane %v1704, 1
        %v1709 = vmul.f32 %v1705, %v1707
        %v1711 = vrot.slane %v1709, 6
        %v1713 = vadd.f32 %v1413, %v1711
        %v1714 = vlaneseq
        %v1715 = vshrl.u32 %v1714, 7
        %v1716 = vsub.s32 1, %v1715
        %v1717 = vrot.slane %v1704, %v1716
        %v1718 = vmul.f32 %v1255, %v1717
        %v1719 = vmul.f32 %v1260, %v1717
        %v1720 = vmul.f32 %v1265, %v1717
        %v1721 = vmul.f32 %v1270, %v1717
        %v1722 = vmul.f32 %v1275, %v1717
        %v1723 = vmul.f32 %v1280, %v1717
        %v1724 = vmul.f32 %v1285, %v1717
        %v1725 = vmul.f32 %v1290, %v1717
        %v1726 = vmul.f32 %v1295, %v1717
        %v1727 = vmul.f32 %v1300, %v1717
        %v1728 = vmul.f32 %v1305, %v1717
        %v1729 = vmul.f32 %v1310, %v1717
        %v1730 = vmul.f32 %v1315, %v1717
        %v1731 = vmul.f32 %v1320, %v1717
        %v1732 = vmul.f32 %v1325, %v1717
        %v1733 = vmul.f32 %v1330, %v1717
        %v1734 = vmul.f32 %v1335, %v1717
        %v1735 = vmul.f32 %v1340, %v1717
        %v1736 = vmul.f32 %v1345, %v1717
        %v1737 = vmul.f32 %v1350, %v1717
        %v1738 = vmul.f32 %v1355, %v1717
        %v1739 = vmul.f32 %v1360, %v1717
        %v1740 = vmul.f32 %v1365, %v1717
        %v1741 = vmul.f32 %v1370, %v1717
        %v1742 = vmul.f32 %v1375, %v1717
        %v1743 = vmul.f32 %v1380, %v1717
        %v1744 = vmul.f32 %v1385, %v1717
        %v1745 = vmul.f32 %v1390, %v1717
        %v1746 = vmul.f32 %v1395, %v1717
        %v1747 = vmul.f32 %v1400, %v1717
        %v1748 = vmul.f32 %v1405, %v1717
        %v1749 = vmul.f32 %v1410, %v1717
        %v1750 = vadd.f32 %v353, %v1718
        %v1751 = vadd.f32 %v354, %v1719
        %v1752 = vadd.f32 %v355, %v1720
        %v1753 = vadd.f32 %v356, %v1721
        %v1754 = vadd.f32 %v357, %v1722
        %v1755 = vadd.f32 %v358, %v1723
        %v1756 = vadd.f32 %v359, %v1724
        %v1757 = vadd.f32 %v360, %v1725
        %v1758 = vadd.f32 %v361, %v1726
        %v1759 = vadd.f32 %v362, %v1727
        %v1760 = vadd.f32 %v363, %v1728
        %v1761 = vadd.f32 %v364, %v1729
        %v1762 = vadd.f32 %v365, %v1730
        %v1763 = vadd.f32 %v366, %v1731
        %v1764 = vadd.f32 %v367, %v1732
        %v1765 = vadd.f32 %v368, %v1733
        %v1766 = vadd.f32 %v369, %v1734
        %v1767 = vadd.f32 %v370, %v1735
        %v1768 = vadd.f32 %v371, %v1736
        %v1769 = vadd.f32 %v372, %v1737
        %v1770 = vadd.f32 %v373, %v1738
        %v1771 = vadd.f32 %v374, %v1739
        %v1772 = vadd.f32 %v375, %v1740
        %v1773 = vadd.f32 %v376, %v1741
        %v1774 = vadd.f32 %v377, %v1742
        %v1775 = vadd.f32 %v378, %v1743
        %v1776 = vadd.f32 %v379, %v1744
        %v1777 = vadd.f32 %v380, %v1745
        %v1778 = vadd.f32 %v381, %v1746
        %v1779 = vadd.f32 %v382, %v1747
        %v1780 = vadd.f32 %v383, %v1748
        %v1781 = vadd.f32 %v384, %v1749
        %v1782 = vlaneseq
        %v1783 = vshrl.u32 %v1782, 7
        %v1784 = vsub.s32 2, %v1783
        %v1785 = vrot.slane %v1713, %v1784
        %v1786 = vadd.f32 %v1750, %v1785
        %v1787 = vadd.f32 %v1751, %v1785
        %v1788 = vadd.f32 %v1752, %v1785
        %v1789 = vadd.f32 %v1753, %v1785
        %v1790 = vadd.f32 %v1754, %v1785
        %v1791 = vadd.f32 %v1755, %v1785
        %v1792 = vadd.f32 %v1756, %v1785
        %v1793 = vadd.f32 %v1757, %v1785
        %v1794 = vadd.f32 %v1758, %v1785
        %v1795 = vadd.f32 %v1759, %v1785
        %v1796 = vadd.f32 %v1760, %v1785
        %v1797 = vadd.f32 %v1761, %v1785
        %v1798 = vadd.f32 %v1762, %v1785
        %v1799 = vadd.f32 %v1763, %v1785
        %v1800 = vadd.f32 %v1764, %v1785
        %v1801 = vadd.f32 %v1765, %v1785
        %v1802 = vadd.f32 %v1766, %v1785
        %v1803 = vadd.f32 %v1767, %v1785
        %v1804 = vadd.f32 %v1768, %v1785
        %v1805 = vadd.f32 %v1769, %v1785
        %v1806 = vadd.f32 %v1770, %v1785
        %v1807 = vadd.f32 %v1771, %v1785
        %v1808 = vadd.f32 %v1772, %v1785
        %v1809 = vadd.f32 %v1773, %v1785
        %v1810 = vadd.f32 %v1774, %v1785
        %v1811 = vadd.f32 %v1775, %v1785
        %v1812 = vadd.f32 %v1776, %v1785
        %v1813 = vadd.f32 %v1777, %v1785
        %v1814 = vadd.f32 %v1778, %v1785
        %v1815 = vadd.f32 %v1779, %v1785
        %v1816 = vadd.f32 %v1780, %v1785
        %v1817 = vadd.f32 %v1781, %v1785
        %v1818 = vmax.f32 %v1786, 0.0
        %v1819 = vmax.f32 %v1787, 0.0
        %v1820 = vmax.f32 %v1788, 0.0
        %v1821 = vmax.f32 %v1789, 0.0
        %v1822 = vmax.f32 %v1790, 0.0
        %v1823 = vmax.f32 %v1791, 0.0
        %v1824 = vmax.f32 %v1792, 0.0
        %v1825 = vmax.f32 %v1793, 0.0
        %v1826 = vmax.f32 %v1794, 0.0
        %v1827 = vmax.f32 %v1795, 0.0
        %v1828 = vmax.f32 %v1796, 0.0
        %v1829 = vmax.f32 %v1797, 0.0
        %v1830 = vmax.f32 %v1798, 0.0
        %v1831 = vmax.f32 %v1799, 0.0
        %v1832 = vmax.f32 %v1800, 0.0
        %v1833 = vmax.f32 %v1801, 0.0
        %v1834 = vmax.f32 %v1802, 0.0
        %v1835 = vmax.f32 %v1803, 0.0
        %v1836 = vmax.f32 %v1804, 0.0
        %v1837 = vmax.f32 %v1805, 0.0
        %v1838 = vmax.f32 %v1806, 0.0
        %v1839 = vmax.f32 %v1807, 0.0
        %v1840 = vmax.f32 %v1808, 0.0
        %v1841 = vmax.f32 %v1809, 0.0
        %v1842 = vmax.f32 %v1810, 0.0
        %v1843 = vmax.f32 %v1811, 0.0
        %v1844 = vmax.f32 %v1812, 0.0
        %v1845 = vmax.f32 %v1813, 0.0
        %v1846 = vmax.f32 %v1814, 0.0
        %v1847 = vmax.f32 %v1815, 0.0
        %v1848 = vmax.f32 %v1816, 0.0
        %v1849 = vmax.f32 %v1817, 0.0
        %1850 = vst [vmem:[%s350] sm:$0xff] %v1818
        %1851 = vst [vmem:[%s350 + $0x8] sm:$0xff] %v1819
        %1852 = vst [vmem:[%s350 + $0x10] sm:$0xff] %v1820
        %1853 = vst [vmem:[%s350 + $0x18] sm:$0xff] %v1821
        %1854 = vst [vmem:[%s350 + $0x20] sm:$0xff] %v1822
        %1855 = vst [vmem:[%s350 + $0x28] sm:$0xff] %v1823
        %1856 = vst [vmem:[%s350 + $0x30] sm:$0xff] %v1824
        %1857 = vst [vmem:[%s350 + $0x38] sm:$0xff] %v1825
        %1858 = vst [vmem:[%s350 + $0x40] sm:$0xff] %v1826
        %1859 = vst [vmem:[%s350 + $0x48] sm:$0xff] %v1827
        %1860 = vst [vmem:[%s350 + $0x50] sm:$0xff] %v1828
        %1861 = vst [vmem:[%s350 + $0x58] sm:$0xff] %v1829
        %1862 = vst [vmem:[%s350 + $0x60] sm:$0xff] %v1830
        %1863 = vst [vmem:[%s350 + $0x68] sm:$0xff] %v1831
        %1864 = vst [vmem:[%s350 + $0x70] sm:$0xff] %v1832
        %1865 = vst [vmem:[%s350 + $0x78] sm:$0xff] %v1833
        %1866 = vst [vmem:[%s350 + $0x80] sm:$0xff] %v1834
        %1867 = vst [vmem:[%s350 + $0x88] sm:$0xff] %v1835
        %1868 = vst [vmem:[%s350 + $0x90] sm:$0xff] %v1836
        %1869 = vst [vmem:[%s350 + $0x98] sm:$0xff] %v1837
        %1870 = vst [vmem:[%s350 + $0xa0] sm:$0xff] %v1838
        %1871 = vst [vmem:[%s350 + $0xa8] sm:$0xff] %v1839
        %1872 = vst [vmem:[%s350 + $0xb0] sm:$0xff] %v1840
        %1873 = vst [vmem:[%s350 + $0xb8] sm:$0xff] %v1841
        %1874 = vst [vmem:[%s350 + $0xc0] sm:$0xff] %v1842
        %1875 = vst [vmem:[%s350 + $0xc8] sm:$0xff] %v1843
        %1876 = vst [vmem:[%s350 + $0xd0] sm:$0xff] %v1844
        %1877 = vst [vmem:[%s350 + $0xd8] sm:$0xff] %v1845
        %1878 = vst [vmem:[%s350 + $0xe0] sm:$0xff] %v1846
        %1879 = vst [vmem:[%s350 + $0xe8] sm:$0xff] %v1847
        %1880 = vst [vmem:[%s350 + $0xf0] sm:$0xff] %v1848
        %1881 = vst [vmem:[%s350 + $0xf8] sm:$0xff] %v1849
        %s1882 = sand.u32 %s228, 1
        %s1883 = scalar_lea.sflag [#allocation4], %s1882
        %s1884 = sand.u32 %s228, 1
        %s1885 = smul.addr %s1884, 256
        %s1886 = scalar_lea.vmem [#allocation5], %s1885
        // Predicated region
        $region61: #{tpu_custom_call.1} parent=55 // pred_check
          %p1887 = pneg %p238
        $region62: #{tpu_custom_call.1} parent=55 // pred_check_branch
          %1889 = sbr.rel (%p1887) target = $region64
        $region63: #{tpu_custom_call.1} parent=55 // pred_region
          %s1890 = smul.u32 32, %s26
          %s1892 = ssub.s32 4096, 4096
          %1893 = vsyncadd %s1883, %s1892
          %s1894 = smul.addr %s1890, 128
          %s1895 = scalar_lea.hbm %s9, %s1894
          %s1896 = sshll.u32 %s1886, 4
          %s1897 = int_to_ptr.vmem [resolvable:$true] %s1896
          %1902 = dma.vmem_to_hbm [thread:$0]  %s1897, 4096, %s1895, %s1883, 128, 128, 8
        $region64: #{tpu_custom_call.1} parent=55 // pred_fallthru
          _
      $region56: #{tpu_custom_call.1} parent=5 // pred_fallthru
        _
      %p1903 = scmp.le.s32.totalorder 2, %s21
      // Predicated region
      $region65: #{tpu_custom_call.1} parent=5 // pred_check
        %p1904 = pneg %p1903
      $region66: #{tpu_custom_call.1} parent=5 // pred_check_branch
        %1906 = sbr.rel (%p1904) target = $region68
      $region67: #{tpu_custom_call.1} parent=5 // pred_region
        %s1907 = ssub.s32 %s21, 2
        // Predicated region
        $region69: #{tpu_custom_call.1} parent=67 // pred_check
          %p1908 = pneg %p244
        $region70: #{tpu_custom_call.1} parent=67 // pred_check_branch
          %1910 = sbr.rel (%p1908) target = $region72
        $region71: #{tpu_custom_call.1} parent=67 // pred_region
          %s1911 = sand.u32 %s229, 1
          %s1912 = scalar_lea.sflag [#allocation4], %s1911
          %s1913 = sand.u32 %s229, 1
          %s1914 = smul.addr %s1913, 256
          %s1915 = scalar_lea.vmem [#allocation5], %s1914
          %1916 = dma.done %s1912, 4096
        $region72: #{tpu_custom_call.1} parent=67 // pred_fallthru
          _
      $region68: #{tpu_custom_call.1} parent=5 // pred_fallthru
        _
    $region6: #{tpu_custom_call.1} parent=1 // loop_footer
      %s25 = sadd.s32 1, %s21
    $region7: #{tpu_custom_call.1} parent=1 // loop_footer_branch
      %20 = sbr.rel target = $region3
    $region8: #{tpu_custom_call.1} parent=1 // loop_exit
      _
    %1917 = vsyncpa [#allocation3], 1
    %s1918 = scalar_lea.sflag [#allocation3], 1
    %1919 = vsyncpa %s1918, 1
    %1920 = vsyncpa [#allocation4], 1
    %s1921 = scalar_lea.sflag [#allocation4], 1
    %1922 = vsyncpa %s1921, 1

</llo_original>
